<compile_context>
chip_gen: v6e
topology: v6e:2x2x1
jax: 0.10.0
libtpu: 0.0.40
codegen_flags: <defaults>
</compile_context>

<pallas_src>
from functools import partial

import jax
import jax.numpy as jnp
from jax.experimental import pallas as pl
from jax.experimental.pallas import tpu as pltpu

LATENT_SIZE = 100
NUM_CLASSES = 10
IMAGE_SIZE = 28 * 28                  # 784
H1 = 256
H2 = 512
IN_DIM = LATENT_SIZE + NUM_CLASSES    # 110
IN_PAD = 128                          # lane-aligned K for layer 1
MAX_BATCH_TILE = 512                  # ~5.6 MB VMEM double-buffered at 512 rows
L3_CHUNK = 256                        # layer-3 N-chunk width (lane multiple)


def _round_up(x, m):
    return ((x + m - 1) // m) * m


def _l3_chunks(total, chunk):
    out, s = [], 0
    while s < total:
        out.append((s, min(chunk, total - s)))
        s += chunk
    return tuple(out)


_L3_CHUNKS = _l3_chunks(IMAGE_SIZE, L3_CHUNK)   # ((0,256),(256,256),(512,256),(768,16))


def _is_v7x():
    try:
        return "v7" in jax.devices()[0].device_kind.lower()
    except Exception:
        return False


_V7X_TWO_CORES = _is_v7x()


def _const_spec(shape):
    # Grid-invariant operand (constant index_map): Pallas fetches it once.
    # TODO(synk): pipeline_mode=pl.Buffered(1) on v7x to drop the second buffer.
    return pl.BlockSpec(shape, lambda *_: (0,) * len(shape))


def _gen_mlp_kernel(x_ref, w1_ref, b1_ref, w2_ref, b2_ref, w3_ref, b3_ref, o_ref):
    """Fused 3-layer MLP: (ReLU o Linear) x2 then Tanh o Linear.

    Matmuls run with bf16 operands on the MXU, accumulating in f32; bias adds,
    ReLUs and tanh run in f32 on the VPU/EUP.  Layer 3 is chunked over the
    output width so tanh + store of one slice overlap the MXU work of the next.
    """
    x = x_ref[...]                                                   # (bt, 128) bf16

    h1 = jnp.dot(x, w1_ref[...], preferred_element_type=jnp.float32) + b1_ref[...]
    h1 = jnp.maximum(h1, 0.0).astype(jnp.bfloat16)                   # ReLU -> bf16 for MXU

    h2 = jnp.dot(h1, w2_ref[...], preferred_element_type=jnp.float32) + b2_ref[...]
    h2 = jnp.maximum(h2, 0.0).astype(jnp.bfloat16)                   # ReLU -> bf16

    # Layer 3, statically unrolled N-chunks (256/256/256/16):
    for start, width in _L3_CHUNKS:
        h3 = jnp.dot(h2, w3_ref[:, start:start + width],
                     preferred_element_type=jnp.float32) + b3_ref[:, start:start + width]
        o_ref[:, start:start + width] = jnp.tanh(h3).astype(o_ref.dtype)


def prepare_params(params):
    """One-time weight prep (padding + bf16 casts), hoisted out of the hot path."""
    w1 = jnp.asarray(params["w1"], jnp.float32)
    w1p = jnp.pad(w1, ((0, IN_PAD - IN_DIM), (0, 0))).astype(jnp.bfloat16)   # (128, 256)
    return {
        "emb": jnp.asarray(params["emb"], jnp.bfloat16),                     # (10, 10)
        "w1": w1p,
        "b1": jnp.asarray(params["b1"], jnp.float32).reshape(1, H1),
        "w2": jnp.asarray(params["w2"], jnp.bfloat16),                       # (256, 512)
        "b2": jnp.asarray(params["b2"], jnp.float32).reshape(1, H2),
        "w3": jnp.asarray(params["w3"], jnp.bfloat16),                       # (512, 784)
        "b3": jnp.asarray(params["b3"], jnp.float32).reshape(1, IMAGE_SIZE),
    }


@partial(jax.jit, static_argnames=("out_dtype",))
def generator_forward(z, labels, prep, out_dtype=jnp.float32):
    """Pallas-backed forward pass of the ACGAN Generator.

    z:      (B, LATENT_SIZE) float
    labels: (B,)             int
    prep:   output of prepare_params()
    returns (B, IMAGE_SIZE)  out_dtype (float32 by default)
    """
    B = z.shape[0]
    z = z.reshape(B, LATENT_SIZE)
    labels = labels.astype(jnp.int32)

    # Cheap glue (bf16 to halve activation bytes): embedding gather + concat + lane pad.
    c = jnp.take(prep["emb"], labels, axis=0)                         # (B, 10) bf16
    x = jnp.concatenate([z.astype(jnp.bfloat16), c], axis=1)          # (B, 110)
    x = jnp.pad(x, ((0, 0), (0, IN_PAD - IN_DIM)))                    # (B, 128)

    # --- adaptive batch tiling (multiples of 16 for bf16 sublane packing) ---
    B_pad16 = _round_up(B, 16)
    bt = min(MAX_BATCH_TILE, B_pad16)
    if _V7X_TWO_CORES and bt == B_pad16 and B_pad16 >= 32:
        # v7x only: >=2 grid steps lets the "parallel" batch axis shard across
        # the two TensorCores.  On single-TC v5e/v6e keep one big step.
        bt = _round_up(B_pad16 // 2, 16)
    B_pad = _round_up(B, bt)
    if B_pad != B:
        x = jnp.pad(x, ((0, B_pad - B), (0, 0)))

    grid = (B_pad // bt,)

    out = pl.pallas_call(
        _gen_mlp_kernel,
        out_shape=jax.ShapeDtypeStruct((B_pad, IMAGE_SIZE), out_dtype),
        grid_spec=pltpu.PrefetchScalarGridSpec(
            num_scalar_prefetch=0,
            grid=grid,
            in_specs=[
                pl.BlockSpec((bt, IN_PAD), lambda i: (i, 0)),   # x tile (bf16)
                _const_spec((IN_PAD, H1)),                      # w1 (bf16, padded K)
                _const_spec((1, H1)),                           # b1 (f32)
                _const_spec((H1, H2)),                          # w2 (bf16)
                _const_spec((1, H2)),                           # b2 (f32)
                _const_spec((H2, IMAGE_SIZE)),                  # w3 (bf16, full 784 wide)
                _const_spec((1, IMAGE_SIZE)),                   # b3 (f32)
            ],
            out_specs=pl.BlockSpec((bt, IMAGE_SIZE), lambda i: (i, 0)),
        ),
        compiler_params=pltpu.CompilerParams(
            dimension_semantics=("parallel",),
        ),
    )(x, prep["w1"], prep["b1"], prep["w2"], prep["b2"], prep["w3"], prep["b3"])

    if B_pad != B:
        out = out[:B]
    return out


def init_params(key):
    """Deterministic parameter init matching the PyTorch module's shapes."""
    keys = jax.random.split(key, 7)

    def uniform_linear(kw, kb, fan_in, fan_out):
        # PyTorch nn.Linear default: U(-1/sqrt(fan_in), 1/sqrt(fan_in))
        bound = 1.0 / jnp.sqrt(jnp.float32(fan_in))
        w = jax.random.uniform(kw, (fan_in, fan_out), jnp.float32, -bound, bound)
        b = jax.random.uniform(kb, (1, fan_out), jnp.float32, -bound, bound)
        return w, b

    emb = jax.random.normal(keys[0], (NUM_CLASSES, NUM_CLASSES), jnp.float32)  # N(0,1) like nn.Embedding
    w1, b1 = uniform_linear(keys[1], keys[2], IN_DIM, H1)
    w2, b2 = uniform_linear(keys[3], keys[4], H1, H2)
    w3, b3 = uniform_linear(keys[5], keys[6], H2, IMAGE_SIZE)
    return {"emb": emb, "w1": w1, "b1": b1, "w2": w2, "b2": b2, "w3": w3, "b3": b3}


def _reference_forward(z, labels, params):
    """Plain JAX f32 reference for correctness checking."""
    c = jnp.take(params["emb"], labels, axis=0)
    x = jnp.concatenate([z.reshape(z.shape[0], LATENT_SIZE), c], axis=1)
    h = jnp.maximum(x @ params["w1"] + params["b1"], 0.0)
    h = jnp.maximum(h @ params["w2"] + params["b2"], 0.0)
    return jnp.tanh(h @ params["w3"] + params["b3"])


if __name__ == "__main__":
    key = jax.random.PRNGKey(0)
    k_param, k_z, k_lab = jax.random.split(key, 3)

    params = init_params(k_param)
    prep = prepare_params(params)        # one-time prep, outside the hot path

    B = 8
    z = jax.random.normal(k_z, (B, LATENT_SIZE), jnp.float32)
    labels = jax.random.randint(k_lab, (B,), 0, NUM_CLASSES, dtype=jnp.int32)

    out = generator_forward(z, labels, prep)
    out = jax.block_until_ready(out)

    assert out.shape == (B, IMAGE_SIZE), out.shape
    assert out.dtype == jnp.float32, out.dtype

    ref = _reference_forward(z, labels, params)
    # bf16 MXU operands / bf16 embedding vs. f32 reference -> relaxed tolerance.
    assert jnp.allclose(out, ref, atol=3e-2, rtol=3e-2), "mismatch vs. reference"

    print("KERNEL_OK")
</pallas_src>

<mosaic_0001>
module attributes {stable_mosaic.version = 11 : i64} {
  func.func @_gen_mlp_kernel(%arg0: i32, %arg1: memref<16x128xbf16, #tpu.memory_space<vmem>>, %arg2: memref<128x256xbf16, #tpu.memory_space<vmem>>, %arg3: memref<1x256xf32, #tpu.memory_space<vmem>>, %arg4: memref<256x512xbf16, #tpu.memory_space<vmem>>, %arg5: memref<1x512xf32, #tpu.memory_space<vmem>>, %arg6: memref<512x784xbf16, #tpu.memory_space<vmem>>, %arg7: memref<1x784xf32, #tpu.memory_space<vmem>>, %arg8: memref<16x784xf32, #tpu.memory_space<vmem>>) attributes {dimension_semantics = [#tpu.dimension_semantics<parallel>], iteration_bounds = array<i64: 1>, scalar_prefetch = 0 : i64, scratch_operands = 0 : i64, tpu.core_type = #tpu.core_type<tc>, window_params = [{transform_indices = @transform_0, window_bounds = array<i64: 16, 128>}, {pipeline_mode = #tpu.pipeline_mode<synchronous>, transform_indices = @transform_1, window_bounds = array<i64: 128, 256>}, {pipeline_mode = #tpu.pipeline_mode<synchronous>, transform_indices = @transform_2, window_bounds = array<i64: 1, 256>}, {pipeline_mode = #tpu.pipeline_mode<synchronous>, transform_indices = @transform_3, window_bounds = array<i64: 256, 512>}, {pipeline_mode = #tpu.pipeline_mode<synchronous>, transform_indices = @transform_4, window_bounds = array<i64: 1, 512>}, {pipeline_mode = #tpu.pipeline_mode<synchronous>, transform_indices = @transform_5, window_bounds = array<i64: 512, 784>}, {pipeline_mode = #tpu.pipeline_mode<synchronous>, transform_indices = @transform_6, window_bounds = array<i64: 1, 784>}, {transform_indices = @transform_7, window_bounds = array<i64: 16, 784>}]} {
    %c0 = arith.constant 0 : index
    %c0_0 = arith.constant 0 : index
    %0 = vector.load %arg1[%c0, %c0_0] : memref<16x128xbf16, #tpu.memory_space<vmem>>, vector<16x128xbf16>
    %c0_1 = arith.constant 0 : index
    %c0_2 = arith.constant 0 : index
    %1 = vector.load %arg2[%c0_1, %c0_2] : memref<128x256xbf16, #tpu.memory_space<vmem>>, vector<128x256xbf16>
    %cst = arith.constant dense<0.000000e+00> : vector<16x256xf32>
    %2 = tpu.matmul %0, %1, %cst {dimension_numbers = #tpu.dot_dimension_numbers<[1], [0], [0], [1], [0, 0, 1, 1], [], []>} : vector<16x128xbf16>, vector<128x256xbf16>, vector<16x256xf32> -> vector<16x256xf32>
    %c0_3 = arith.constant 0 : index
    %c0_4 = arith.constant 0 : index
    %3 = vector.load %arg3[%c0_3, %c0_4] : memref<1x256xf32, #tpu.memory_space<vmem>>, vector<1x256xf32>
    %4 = vector.broadcast %3 : vector<1x256xf32> to vector<16x256xf32>
    %5 = arith.addf %2, %4 : vector<16x256xf32>
    %cst_5 = arith.constant 0.000000e+00 : f32
    %6 = vector.broadcast %cst_5 : f32 to vector<16x256xf32>
    %7 = arith.maximumf %5, %6 : vector<16x256xf32>
    %8 = arith.truncf %7 : vector<16x256xf32> to vector<16x256xbf16>
    %c0_6 = arith.constant 0 : index
    %c0_7 = arith.constant 0 : index
    %9 = vector.load %arg4[%c0_6, %c0_7] : memref<256x512xbf16, #tpu.memory_space<vmem>>, vector<256x512xbf16>
    %cst_8 = arith.constant dense<0.000000e+00> : vector<16x512xf32>
    %10 = tpu.matmul %8, %9, %cst_8 {dimension_numbers = #tpu.dot_dimension_numbers<[1], [0], [0], [1], [0, 0, 1, 1], [], []>} : vector<16x256xbf16>, vector<256x512xbf16>, vector<16x512xf32> -> vector<16x512xf32>
    %c0_9 = arith.constant 0 : index
    %c0_10 = arith.constant 0 : index
    %11 = vector.load %arg5[%c0_9, %c0_10] : memref<1x512xf32, #tpu.memory_space<vmem>>, vector<1x512xf32>
    %12 = vector.broadcast %11 : vector<1x512xf32> to vector<16x512xf32>
    %13 = arith.addf %10, %12 : vector<16x512xf32>
    %cst_11 = arith.constant 0.000000e+00 : f32
    %14 = vector.broadcast %cst_11 : f32 to vector<16x512xf32>
    %15 = arith.maximumf %13, %14 : vector<16x512xf32>
    %16 = arith.truncf %15 : vector<16x512xf32> to vector<16x512xbf16>
    %c0_12 = arith.constant 0 : index
    %c0_13 = arith.constant 0 : index
    %17 = vector.load %arg6[%c0_12, %c0_13] : memref<512x784xbf16, #tpu.memory_space<vmem>>, vector<512x256xbf16>
    %cst_14 = arith.constant dense<0.000000e+00> : vector<16x256xf32>
    %18 = tpu.matmul %16, %17, %cst_14 {dimension_numbers = #tpu.dot_dimension_numbers<[1], [0], [0], [1], [0, 0, 1, 1], [], []>} : vector<16x512xbf16>, vector<512x256xbf16>, vector<16x256xf32> -> vector<16x256xf32>
    %c0_15 = arith.constant 0 : index
    %c0_16 = arith.constant 0 : index
    %19 = vector.load %arg7[%c0_15, %c0_16] : memref<1x784xf32, #tpu.memory_space<vmem>>, vector<1x256xf32>
    %20 = vector.broadcast %19 : vector<1x256xf32> to vector<16x256xf32>
    %21 = arith.addf %18, %20 : vector<16x256xf32>
    %22 = math.tanh %21 : vector<16x256xf32>
    %c0_17 = arith.constant 0 : index
    %c0_18 = arith.constant 0 : index
    %23 = vector.load %arg8[%c0_17, %c0_18] : memref<16x784xf32, #tpu.memory_space<vmem>>, vector<16x256xf32>
    tpu.vector_store %arg8[%c0_17, %c0_18], %22 {strides = array<i32>} : memref<16x784xf32, #tpu.memory_space<vmem>>, vector<16x256xf32>,
    %c0_19 = arith.constant 0 : index
    %c256 = arith.constant 256 : index
    %24 = vector.load %arg6[%c0_19, %c256] : memref<512x784xbf16, #tpu.memory_space<vmem>>, vector<512x256xbf16>
    %cst_20 = arith.constant dense<0.000000e+00> : vector<16x256xf32>
    %25 = tpu.matmul %16, %24, %cst_20 {dimension_numbers = #tpu.dot_dimension_numbers<[1], [0], [0], [1], [0, 0, 1, 1], [], []>} : vector<16x512xbf16>, vector<512x256xbf16>, vector<16x256xf32> -> vector<16x256xf32>
    %c0_21 = arith.constant 0 : index
    %c256_22 = arith.constant 256 : index
    %26 = vector.load %arg7[%c0_21, %c256_22] : memref<1x784xf32, #tpu.memory_space<vmem>>, vector<1x256xf32>
    %27 = vector.broadcast %26 : vector<1x256xf32> to vector<16x256xf32>
    %28 = arith.addf %25, %27 : vector<16x256xf32>
    %29 = math.tanh %28 : vector<16x256xf32>
    %c0_23 = arith.constant 0 : index
    %c256_24 = arith.constant 256 : index
    %30 = vector.load %arg8[%c0_23, %c256_24] : memref<16x784xf32, #tpu.memory_space<vmem>>, vector<16x256xf32>
    tpu.vector_store %arg8[%c0_23, %c256_24], %29 {strides = array<i32>} : memref<16x784xf32, #tpu.memory_space<vmem>>, vector<16x256xf32>,
    %c0_25 = arith.constant 0 : index
    %c512 = arith.constant 512 : index
    %31 = vector.load %arg6[%c0_25, %c512] : memref<512x784xbf16, #tpu.memory_space<vmem>>, vector<512x256xbf16>
    %cst_26 = arith.constant dense<0.000000e+00> : vector<16x256xf32>
    %32 = tpu.matmul %16, %31, %cst_26 {dimension_numbers = #tpu.dot_dimension_numbers<[1], [0], [0], [1], [0, 0, 1, 1], [], []>} : vector<16x512xbf16>, vector<512x256xbf16>, vector<16x256xf32> -> vector<16x256xf32>
    %c0_27 = arith.constant 0 : index
    %c512_28 = arith.constant 512 : index
    %33 = vector.load %arg7[%c0_27, %c512_28] : memref<1x784xf32, #tpu.memory_space<vmem>>, vector<1x256xf32>
    %34 = vector.broadcast %33 : vector<1x256xf32> to vector<16x256xf32>
    %35 = arith.addf %32, %34 : vector<16x256xf32>
    %36 = math.tanh %35 : vector<16x256xf32>
    %c0_29 = arith.constant 0 : index
    %c512_30 = arith.constant 512 : index
    %37 = vector.load %arg8[%c0_29, %c512_30] : memref<16x784xf32, #tpu.memory_space<vmem>>, vector<16x256xf32>
    tpu.vector_store %arg8[%c0_29, %c512_30], %36 {strides = array<i32>} : memref<16x784xf32, #tpu.memory_space<vmem>>, vector<16x256xf32>,
    %c0_31 = arith.constant 0 : index
    %c768 = arith.constant 768 : index
    %38 = vector.load %arg6[%c0_31, %c768] : memref<512x784xbf16, #tpu.memory_space<vmem>>, vector<512x16xbf16>
    %cst_32 = arith.constant dense<0.000000e+00> : vector<16x16xf32>
    %39 = tpu.matmul %16, %38, %cst_32 {dimension_numbers = #tpu.dot_dimension_numbers<[1], [0], [0], [1], [0, 0, 1, 1], [], []>} : vector<16x512xbf16>, vector<512x16xbf16>, vector<16x16xf32> -> vector<16x16xf32>
    %c0_33 = arith.constant 0 : index
    %c768_34 = arith.constant 768 : index
    %40 = vector.load %arg7[%c0_33, %c768_34] : memref<1x784xf32, #tpu.memory_space<vmem>>, vector<1x16xf32>
    %41 = vector.broadcast %40 : vector<1x16xf32> to vector<16x16xf32>
    %42 = arith.addf %39, %41 : vector<16x16xf32>
    %43 = math.tanh %42 : vector<16x16xf32>
    %c0_35 = arith.constant 0 : index
    %c768_36 = arith.constant 768 : index
    %44 = vector.load %arg8[%c0_35, %c768_36] : memref<16x784xf32, #tpu.memory_space<vmem>>, vector<16x16xf32>
    tpu.vector_store %arg8[%c0_35, %c768_36], %43 {strides = array<i32>} : memref<16x784xf32, #tpu.memory_space<vmem>>, vector<16x16xf32>,
    return
  }
  func.func @transform_0(%arg0: i32) -> (i32, i32) {
    %c0_i32 = arith.constant 0 : i32
    %c0_i32_0 = arith.constant 0 : i32
    return %arg0, %c0_i32 : i32, i32
  }
  func.func @transform_1(%arg0: i32) -> (i32, i32) {
    %c0_i32 = arith.constant 0 : i32
    %c0_i32_0 = arith.constant 0 : i32
    %c0_i32_1 = arith.constant 0 : i32
    return %c0_i32, %c0_i32_0 : i32, i32
  }
  func.func @transform_2(%arg0: i32) -> (i32, i32) {
    %c0_i32 = arith.constant 0 : i32
    %c0_i32_0 = arith.constant 0 : i32
    %c0_i32_1 = arith.constant 0 : i32
    return %c0_i32, %c0_i32_0 : i32, i32
  }
  func.func @transform_3(%arg0: i32) -> (i32, i32) {
    %c0_i32 = arith.constant 0 : i32
    %c0_i32_0 = arith.constant 0 : i32
    %c0_i32_1 = arith.constant 0 : i32
    return %c0_i32, %c0_i32_0 : i32, i32
  }
  func.func @transform_4(%arg0: i32) -> (i32, i32) {
    %c0_i32 = arith.constant 0 : i32
    %c0_i32_0 = arith.constant 0 : i32
    %c0_i32_1 = arith.constant 0 : i32
    return %c0_i32, %c0_i32_0 : i32, i32
  }
  func.func @transform_5(%arg0: i32) -> (i32, i32) {
    %c0_i32 = arith.constant 0 : i32
    %c0_i32_0 = arith.constant 0 : i32
    %c0_i32_1 = arith.constant 0 : i32
    return %c0_i32, %c0_i32_0 : i32, i32
  }
  func.func @transform_6(%arg0: i32) -> (i32, i32) {
    %c0_i32 = arith.constant 0 : i32
    %c0_i32_0 = arith.constant 0 : i32
    %c0_i32_1 = arith.constant 0 : i32
    return %c0_i32, %c0_i32_0 : i32, i32
  }
  func.func @transform_7(%arg0: i32) -> (i32, i32) {
    %c0_i32 = arith.constant 0 : i32
    %c0_i32_0 = arith.constant 0 : i32
    return %arg0, %c0_i32 : i32, i32
  }
}

</mosaic_0001>

<llo_original>
// kernel: generator_forward.1
$region0: #{generator_forward.1}
  #allocation0 [shape = 'u32[]', space=smem, size = 0x4, offset = 0x4, fixed_abs, tag = 'smem constant byte address 0x4 - core index']
  #allocation1 [shape = 'u32[144,128]{1,0:T(1,128)}', space=vmem, size = 0x12000, scoped, tag = 'internal scratch']
  %s0 = inlined_call_operand.vmem [shape: bf16[16,128], index: 0, kind: input, shape index: {}]
  %s1 = inlined_call_operand.vmem [shape: bf16[128,256], index: 1, kind: input, shape index: {}]
  %s2 = inlined_call_operand.vmem [shape: f32[1,256], index: 2, kind: input, shape index: {}]
  %s3 = inlined_call_operand.vmem [shape: bf16[256,512], index: 3, kind: input, shape index: {}]
  %s4 = inlined_call_operand.vmem [shape: f32[1,512], index: 4, kind: input, shape index: {}]
  %s5 = inlined_call_operand.vmem [shape: bf16[512,784], index: 5, kind: input, shape index: {}]
  %s6 = inlined_call_operand.vmem [shape: f32[1,784], index: 6, kind: input, shape index: {}]
  %s7 = inlined_call_operand.vmem [shape: f32[16,784], index: 7, kind: output, shape index: {}]
  %s8 = sld [smem:[#allocation0]]
  $region38: #{generator_forward.1} parent=0
    _
  %s10 = ssub.s32 1, %s8
  %s11 = scalar_select 0, %s10, %s8
  // Predicated region
  $region2: #{generator_forward.1} parent=0 // pred_check
    _
  $region3: #{generator_forward.1} parent=0 // pred_check_branch
    %13 = sbr.rel (0) target = $region5
  $region4: #{generator_forward.1} parent=0 // pred_region
    _
  $region5: #{generator_forward.1} parent=0 // pred_fallthru
    _
  // Predicated region
  $region6: #{generator_forward.1} parent=0 // pred_check
    _
  $region7: #{generator_forward.1} parent=0 // pred_check_branch
    %15 = sbr.rel (0) target = $region9
  $region8: #{generator_forward.1} parent=0 // pred_region
    _
  $region9: #{generator_forward.1} parent=0 // pred_fallthru
    _
  // Predicated region
  $region10: #{generator_forward.1} parent=0 // pred_check
    _
  $region11: #{generator_forward.1} parent=0 // pred_check_branch
    %17 = sbr.rel (0) target = $region13
  $region12: #{generator_forward.1} parent=0 // pred_region
    _
  $region13: #{generator_forward.1} parent=0 // pred_fallthru
    _
  // Predicated region
  $region14: #{generator_forward.1} parent=0 // pred_check
    _
  $region15: #{generator_forward.1} parent=0 // pred_check_branch
    %19 = sbr.rel (0) target = $region17
  $region16: #{generator_forward.1} parent=0 // pred_region
    _
  $region17: #{generator_forward.1} parent=0 // pred_fallthru
    _
  // Predicated region
  $region18: #{generator_forward.1} parent=0 // pred_check
    _
  $region19: #{generator_forward.1} parent=0 // pred_check_branch
    %21 = sbr.rel (0) target = $region21
  $region20: #{generator_forward.1} parent=0 // pred_region
    _
  $region21: #{generator_forward.1} parent=0 // pred_fallthru
    _
  // Predicated region
  $region22: #{generator_forward.1} parent=0 // pred_check
    _
  $region23: #{generator_forward.1} parent=0 // pred_check_branch
    %23 = sbr.rel (0) target = $region25
  $region24: #{generator_forward.1} parent=0 // pred_region
    _
  $region25: #{generator_forward.1} parent=0 // pred_fallthru
    _
  // Predicated region
  $region26: #{generator_forward.1} parent=0 // pred_check
    _
  $region27: #{generator_forward.1} parent=0 // pred_check_branch
    %25 = sbr.rel (0) target = $region29
  $region28: #{generator_forward.1} parent=0 // pred_region
    _
  $region29: #{generator_forward.1} parent=0 // pred_fallthru
    _
  %v27 = vld [vmem:[%s0] sm:$0xf]
  %v28 = vld [vmem:[%s0 + $0x4] sm:$0xf]
  %v29 = vld [vmem:[%s1] sm:$0xff]
  %v30 = vld [vmem:[%s1 + $0x8] sm:$0xff]
  %v31 = vld [vmem:[%s1 + $0x10] sm:$0xff]
  %v32 = vld [vmem:[%s1 + $0x18] sm:$0xff]
  %v33 = vld [vmem:[%s1 + $0x20] sm:$0xff]
  %v34 = vld [vmem:[%s1 + $0x28] sm:$0xff]
  %v35 = vld [vmem:[%s1 + $0x30] sm:$0xff]
  %v36 = vld [vmem:[%s1 + $0x38] sm:$0xff]
  %v37 = vld [vmem:[%s1 + $0x40] sm:$0xff]
  %v38 = vld [vmem:[%s1 + $0x48] sm:$0xff]
  %v39 = vld [vmem:[%s1 + $0x50] sm:$0xff]
  %v40 = vld [vmem:[%s1 + $0x58] sm:$0xff]
  %v41 = vld [vmem:[%s1 + $0x60] sm:$0xff]
  %v42 = vld [vmem:[%s1 + $0x68] sm:$0xff]
  %v43 = vld [vmem:[%s1 + $0x70] sm:$0xff]
  %v44 = vld [vmem:[%s1 + $0x78] sm:$0xff]
  %v45 = vld [vmem:[%s2] sm:$0x3]
  %v47 = vlaneseq
  %v48 = vshrl.u32 %v47, 7
  %v49 = vsub.s32 0, %v48
  %v50 = vrot.slane %v45, %v49
  %v51 = vlaneseq
  %v52 = vshrl.u32 %v51, 7
  %v53 = vsub.s32 1, %v52
  %v54 = vrot.slane %v45, %v53
  %v59 = vunpack.c.l.b16 %v27
  %v60 = vunpack.c.l.b16 %v28
  %v61 = vpack.c.b16 %v60, %v59
  %v79 = vunpack.c.l.b16 %v29
  %v80 = vunpack.c.h.b16 %v29
  %v81 = vunpack.c.l.b16 %v30
  %v82 = vunpack.c.h.b16 %v30
  %v83 = vunpack.c.l.b16 %v31
  %v84 = vunpack.c.h.b16 %v31
  %v85 = vunpack.c.l.b16 %v32
  %v86 = vunpack.c.h.b16 %v32
  %v87 = vunpack.c.l.b16 %v33
  %v88 = vunpack.c.h.b16 %v33
  %v89 = vunpack.c.l.b16 %v34
  %v90 = vunpack.c.h.b16 %v34
  %v91 = vunpack.c.l.b16 %v35
  %v92 = vunpack.c.h.b16 %v35
  %v93 = vunpack.c.l.b16 %v36
  %v94 = vunpack.c.h.b16 %v36
  %v95 = vunpack.c.l.b16 %v37
  %v96 = vunpack.c.h.b16 %v37
  %v97 = vunpack.c.l.b16 %v38
  %v98 = vunpack.c.h.b16 %v38
  %v99 = vunpack.c.l.b16 %v39
  %v100 = vunpack.c.h.b16 %v39
  %v101 = vunpack.c.l.b16 %v40
  %v102 = vunpack.c.h.b16 %v40
  %v103 = vunpack.c.l.b16 %v41
  %v104 = vunpack.c.h.b16 %v41
  %v105 = vunpack.c.l.b16 %v42
  %v106 = vunpack.c.h.b16 %v42
  %v107 = vunpack.c.l.b16 %v43
  %v108 = vunpack.c.h.b16 %v43
  %v109 = vunpack.c.l.b16 %v44
  %v110 = vunpack.c.h.b16 %v44
  %v111 = vpack.c.b16 %v81, %v79
  %v112 = vpack.c.b16 %v82, %v80
  %v113 = vpack.c.b16 %v85, %v83
  %v114 = vpack.c.b16 %v86, %v84
  %v115 = vpack.c.b16 %v89, %v87
  %v116 = vpack.c.b16 %v90, %v88
  %v117 = vpack.c.b16 %v93, %v91
  %v118 = vpack.c.b16 %v94, %v92
  %v119 = vpack.c.b16 %v97, %v95
  %v120 = vpack.c.b16 %v98, %v96
  %v121 = vpack.c.b16 %v101, %v99
  %v122 = vpack.c.b16 %v102, %v100
  %v123 = vpack.c.b16 %v105, %v103
  %v124 = vpack.c.b16 %v106, %v104
  %v125 = vpack.c.b16 %v109, %v107
  %v126 = vpack.c.b16 %v110, %v108
  %143 = vmatprep.subr.bf16.mxu0 %v126
  %144 = vmatpush1.bf16.msra.mxu0 %v125
  %145 = vmatprep.subr.bf16.mxu0 %v124
  %146 = vmatpush1.bf16.msra.mxu0 %v123
  %147 = vmatprep.subr.bf16.mxu0 %v122
  %148 = vmatpush1.bf16.msra.mxu0 %v121
  %149 = vmatprep.subr.bf16.mxu0 %v120
  %150 = vmatpush1.bf16.msra.mxu0 %v119
  %151 = vmatprep.subr.bf16.mxu0 %v118
  %152 = vmatpush1.bf16.msra.mxu0 %v117
  %153 = vmatprep.subr.bf16.mxu0 %v116
  %154 = vmatpush1.bf16.msra.mxu0 %v115
  %155 = vmatprep.subr.bf16.mxu0 %v114
  %156 = vmatpush1.bf16.msra.mxu0 %v113
  %157 = vmatprep.subr.bf16.mxu0 %v112
  %158 = vmatpush1.bf16.msra.mxu0 %v111
  %159 = vmatprep.subr.bf16.mxu0 0
  %160 = vmatpush2.bf16.msra.mxu0 0
  %161 = vmatprep.subr.bf16.mxu0 0
  %162 = vmatpush2.bf16.msra.mxu0 0
  %163 = vmatprep.subr.bf16.mxu0 0
  %164 = vmatpush2.bf16.msra.mxu0 0
  %165 = vmatprep.subr.bf16.mxu0 0
  %166 = vmatpush2.bf16.msra.mxu0 0
  %167 = vmatprep.subr.bf16.mxu0 0
  %168 = vmatpush2.bf16.msra.mxu0 0
  %169 = vmatprep.subr.bf16.mxu0 0
  %170 = vmatpush2.bf16.msra.mxu0 0
  %171 = vmatprep.subr.bf16.mxu0 0
  %172 = vmatpush2.bf16.msra.mxu0 0
  %173 = vmatprep.subr.bf16.mxu0 0
  %174 = vmatpush2.bf16.msra.mxu0 0
  %175 = vmatprep.mubr.bf16.mxu0 0
  %176 = vmatmul.mubr.bf16.gmra.mxu0 %v61
  %v177 = vpop.f32.mrf.mxu0
  %v178 = vadd.f32 %v50, %v177
  %v179 = vpop.f32.mrf.mxu0
  %v180 = vadd.f32 %v54, %v179
  %v181 = vpop.f32.mrf.mxu0
  %v182 = vadd.f32 %v50, %v181
  %v183 = vpop.f32.mrf.mxu0
  %v184 = vadd.f32 %v54, %v183
  %185 = vdwg.mxu0
  %v186 = vmax.f32 %v178, 0.0
  %v187 = vmax.f32 %v180, 0.0
  %v188 = vmax.f32 %v182, 0.0
  %v189 = vmax.f32 %v184, 0.0
  %v190 = vpack.c.bf16 %v188, %v186
  %v191 = vpack.c.bf16 %v189, %v187
  %v192 = vld [vmem:[%s3] sm:$0xff]
  %v193 = vld [vmem:[%s3 + $0x8] sm:$0xff]
  %v194 = vld [vmem:[%s3 + $0x10] sm:$0xff]
  %v195 = vld [vmem:[%s3 + $0x18] sm:$0xff]
  %v196 = vld [vmem:[%s3 + $0x20] sm:$0xff]
  %v197 = vld [vmem:[%s3 + $0x28] sm:$0xff]
  %v198 = vld [vmem:[%s3 + $0x30] sm:$0xff]
  %v199 = vld [vmem:[%s3 + $0x38] sm:$0xff]
  %v200 = vld [vmem:[%s3 + $0x40] sm:$0xff]
  %v201 = vld [vmem:[%s3 + $0x48] sm:$0xff]
  %v202 = vld [vmem:[%s3 + $0x50] sm:$0xff]
  %v203 = vld [vmem:[%s3 + $0x58] sm:$0xff]
  %v204 = vld [vmem:[%s3 + $0x60] sm:$0xff]
  %v205 = vld [vmem:[%s3 + $0x68] sm:$0xff]
  %v206 = vld [vmem:[%s3 + $0x70] sm:$0xff]
  %v207 = vld [vmem:[%s3 + $0x78] sm:$0xff]
  %v208 = vld [vmem:[%s3 + $0x80] sm:$0xff]
  %v209 = vld [vmem:[%s3 + $0x88] sm:$0xff]
  %v210 = vld [vmem:[%s3 + $0x90] sm:$0xff]
  %v211 = vld [vmem:[%s3 + $0x98] sm:$0xff]
  %v212 = vld [vmem:[%s3 + $0xa0] sm:$0xff]
  %v213 = vld [vmem:[%s3 + $0xa8] sm:$0xff]
  %v214 = vld [vmem:[%s3 + $0xb0] sm:$0xff]
  %v215 = vld [vmem:[%s3 + $0xb8] sm:$0xff]
  %v216 = vld [vmem:[%s3 + $0xc0] sm:$0xff]
  %v217 = vld [vmem:[%s3 + $0xc8] sm:$0xff]
  %v218 = vld [vmem:[%s3 + $0xd0] sm:$0xff]
  %v219 = vld [vmem:[%s3 + $0xd8] sm:$0xff]
  %v220 = vld [vmem:[%s3 + $0xe0] sm:$0xff]
  %v221 = vld [vmem:[%s3 + $0xe8] sm:$0xff]
  %v222 = vld [vmem:[%s3 + $0xf0] sm:$0xff]
  %v223 = vld [vmem:[%s3 + $0xf8] sm:$0xff]
  %v224 = vld [vmem:[%s3 + $0x100] sm:$0xff]
  %v225 = vld [vmem:[%s3 + $0x108] sm:$0xff]
  %v226 = vld [vmem:[%s3 + $0x110] sm:$0xff]
  %v227 = vld [vmem:[%s3 + $0x118] sm:$0xff]
  %v228 = vld [vmem:[%s3 + $0x120] sm:$0xff]
  %v229 = vld [vmem:[%s3 + $0x128] sm:$0xff]
  %v230 = vld [vmem:[%s3 + $0x130] sm:$0xff]
  %v231 = vld [vmem:[%s3 + $0x138] sm:$0xff]
  %v232 = vld [vmem:[%s3 + $0x140] sm:$0xff]
  %v233 = vld [vmem:[%s3 + $0x148] sm:$0xff]
  %v234 = vld [vmem:[%s3 + $0x150] sm:$0xff]
  %v235 = vld [vmem:[%s3 + $0x158] sm:$0xff]
  %v236 = vld [vmem:[%s3 + $0x160] sm:$0xff]
  %v237 = vld [vmem:[%s3 + $0x168] sm:$0xff]
  %v238 = vld [vmem:[%s3 + $0x170] sm:$0xff]
  %v239 = vld [vmem:[%s3 + $0x178] sm:$0xff]
  %v240 = vld [vmem:[%s3 + $0x180] sm:$0xff]
  %v241 = vld [vmem:[%s3 + $0x188] sm:$0xff]
  %v242 = vld [vmem:[%s3 + $0x190] sm:$0xff]
  %v243 = vld [vmem:[%s3 + $0x198] sm:$0xff]
  %v244 = vld [vmem:[%s3 + $0x1a0] sm:$0xff]
  %v245 = vld [vmem:[%s3 + $0x1a8] sm:$0xff]
  %v246 = vld [vmem:[%s3 + $0x1b0] sm:$0xff]
  %v247 = vld [vmem:[%s3 + $0x1b8] sm:$0xff]
  %v248 = vld [vmem:[%s3 + $0x1c0] sm:$0xff]
  %v249 = vld [vmem:[%s3 + $0x1c8] sm:$0xff]
  %v250 = vld [vmem:[%s3 + $0x1d0] sm:$0xff]
  %v251 = vld [vmem:[%s3 + $0x1d8] sm:$0xff]
  %v252 = vld [vmem:[%s3 + $0x1e0] sm:$0xff]
  %v253 = vld [vmem:[%s3 + $0x1e8] sm:$0xff]
  %v254 = vld [vmem:[%s3 + $0x1f0] sm:$0xff]
  %v255 = vld [vmem:[%s3 + $0x1f8] sm:$0xff]
  %v256 = vld [vmem:[%s4] sm:$0xf]
  %v258 = vlaneseq
  %v259 = vshrl.u32 %v258, 7
  %v260 = vsub.s32 0, %v259
  %v261 = vrot.slane %v256, %v260
  %v262 = vlaneseq
  %v263 = vshrl.u32 %v262, 7
  %v264 = vsub.s32 1, %v263
  %v265 = vrot.slane %v256, %v264
  %v266 = vlaneseq
  %v267 = vshrl.u32 %v266, 7
  %v268 = vsub.s32 2, %v267
  %v269 = vrot.slane %v256, %v268
  %v270 = vlaneseq
  %v271 = vshrl.u32 %v270, 7
  %v272 = vsub.s32 3, %v271
  %v273 = vrot.slane %v256, %v272
  %v342 = vunpack.c.l.b16 %v192
  %v343 = vunpack.c.h.b16 %v192
  %v344 = vunpack.c.l.b16 %v193
  %v345 = vunpack.c.h.b16 %v193
  %v346 = vunpack.c.l.b16 %v194
  %v347 = vunpack.c.h.b16 %v194
  %v348 = vunpack.c.l.b16 %v195
  %v349 = vunpack.c.h.b16 %v195
  %v350 = vunpack.c.l.b16 %v196
  %v351 = vunpack.c.h.b16 %v196
  %v352 = vunpack.c.l.b16 %v197
  %v353 = vunpack.c.h.b16 %v197
  %v354 = vunpack.c.l.b16 %v198
  %v355 = vunpack.c.h.b16 %v198
  %v356 = vunpack.c.l.b16 %v199
  %v357 = vunpack.c.h.b16 %v199
  %v358 = vunpack.c.l.b16 %v200
  %v359 = vunpack.c.h.b16 %v200
  %v360 = vunpack.c.l.b16 %v201
  %v361 = vunpack.c.h.b16 %v201
  %v362 = vunpack.c.l.b16 %v202
  %v363 = vunpack.c.h.b16 %v202
  %v364 = vunpack.c.l.b16 %v203
  %v365 = vunpack.c.h.b16 %v203
  %v366 = vunpack.c.l.b16 %v204
  %v367 = vunpack.c.h.b16 %v204
  %v368 = vunpack.c.l.b16 %v205
  %v369 = vunpack.c.h.b16 %v205
  %v370 = vunpack.c.l.b16 %v206
  %v371 = vunpack.c.h.b16 %v206
  %v372 = vunpack.c.l.b16 %v207
  %v373 = vunpack.c.h.b16 %v207
  %v374 = vunpack.c.l.b16 %v208
  %v375 = vunpack.c.h.b16 %v208
  %v376 = vunpack.c.l.b16 %v209
  %v377 = vunpack.c.h.b16 %v209
  %v378 = vunpack.c.l.b16 %v210
  %v379 = vunpack.c.h.b16 %v210
  %v380 = vunpack.c.l.b16 %v211
  %v381 = vunpack.c.h.b16 %v211
  %v382 = vunpack.c.l.b16 %v212
  %v383 = vunpack.c.h.b16 %v212
  %v384 = vunpack.c.l.b16 %v213
  %v385 = vunpack.c.h.b16 %v213
  %v386 = vunpack.c.l.b16 %v214
  %v387 = vunpack.c.h.b16 %v214
  %v388 = vunpack.c.l.b16 %v215
  %v389 = vunpack.c.h.b16 %v215
  %v390 = vunpack.c.l.b16 %v216
  %v391 = vunpack.c.h.b16 %v216
  %v392 = vunpack.c.l.b16 %v217
  %v393 = vunpack.c.h.b16 %v217
  %v394 = vunpack.c.l.b16 %v218
  %v395 = vunpack.c.h.b16 %v218
  %v396 = vunpack.c.l.b16 %v219
  %v397 = vunpack.c.h.b16 %v219
  %v398 = vunpack.c.l.b16 %v220
  %v399 = vunpack.c.h.b16 %v220
  %v400 = vunpack.c.l.b16 %v221
  %v401 = vunpack.c.h.b16 %v221
  %v402 = vunpack.c.l.b16 %v222
  %v403 = vunpack.c.h.b16 %v222
  %v404 = vunpack.c.l.b16 %v223
  %v405 = vunpack.c.h.b16 %v223
  %v406 = vunpack.c.l.b16 %v224
  %v407 = vunpack.c.h.b16 %v224
  %v408 = vunpack.c.l.b16 %v225
  %v409 = vunpack.c.h.b16 %v225
  %v410 = vunpack.c.l.b16 %v226
  %v411 = vunpack.c.h.b16 %v226
  %v412 = vunpack.c.l.b16 %v227
  %v413 = vunpack.c.h.b16 %v227
  %v414 = vunpack.c.l.b16 %v228
  %v415 = vunpack.c.h.b16 %v228
  %v416 = vunpack.c.l.b16 %v229
  %v417 = vunpack.c.h.b16 %v229
  %v418 = vunpack.c.l.b16 %v230
  %v419 = vunpack.c.h.b16 %v230
  %v420 = vunpack.c.l.b16 %v231
  %v421 = vunpack.c.h.b16 %v231
  %v422 = vunpack.c.l.b16 %v232
  %v423 = vunpack.c.h.b16 %v232
  %v424 = vunpack.c.l.b16 %v233
  %v425 = vunpack.c.h.b16 %v233
  %v426 = vunpack.c.l.b16 %v234
  %v427 = vunpack.c.h.b16 %v234
  %v428 = vunpack.c.l.b16 %v235
  %v429 = vunpack.c.h.b16 %v235
  %v430 = vunpack.c.l.b16 %v236
  %v431 = vunpack.c.h.b16 %v236
  %v432 = vunpack.c.l.b16 %v237
  %v433 = vunpack.c.h.b16 %v237
  %v434 = vunpack.c.l.b16 %v238
  %v435 = vunpack.c.h.b16 %v238
  %v436 = vunpack.c.l.b16 %v239
  %v437 = vunpack.c.h.b16 %v239
  %v438 = vunpack.c.l.b16 %v240
  %v439 = vunpack.c.h.b16 %v240
  %v440 = vunpack.c.l.b16 %v241
  %v441 = vunpack.c.h.b16 %v241
  %v442 = vunpack.c.l.b16 %v242
  %v443 = vunpack.c.h.b16 %v242
  %v444 = vunpack.c.l.b16 %v243
  %v445 = vunpack.c.h.b16 %v243
  %v446 = vunpack.c.l.b16 %v244
  %v447 = vunpack.c.h.b16 %v244
  %v448 = vunpack.c.l.b16 %v245
  %v449 = vunpack.c.h.b16 %v245
  %v450 = vunpack.c.l.b16 %v246
  %v451 = vunpack.c.h.b16 %v246
  %v452 = vunpack.c.l.b16 %v247
  %v453 = vunpack.c.h.b16 %v247
  %v454 = vunpack.c.l.b16 %v248
  %v455 = vunpack.c.h.b16 %v248
  %v456 = vunpack.c.l.b16 %v249
  %v457 = vunpack.c.h.b16 %v249
  %v458 = vunpack.c.l.b16 %v250
  %v459 = vunpack.c.h.b16 %v250
  %v460 = vunpack.c.l.b16 %v251
  %v461 = vunpack.c.h.b16 %v251
  %v462 = vunpack.c.l.b16 %v252
  %v463 = vunpack.c.h.b16 %v252
  %v464 = vunpack.c.l.b16 %v253
  %v465 = vunpack.c.h.b16 %v253
  %v466 = vunpack.c.l.b16 %v254
  %v467 = vunpack.c.h.b16 %v254
  %v468 = vunpack.c.l.b16 %v255
  %v469 = vunpack.c.h.b16 %v255
  %v470 = vpack.c.b16 %v346, %v342
  %v471 = vpack.c.b16 %v347, %v343
  %v472 = vpack.c.b16 %v348, %v344
  %v473 = vpack.c.b16 %v349, %v345
  %v474 = vpack.c.b16 %v354, %v350
  %v475 = vpack.c.b16 %v355, %v351
  %v476 = vpack.c.b16 %v356, %v352
  %v477 = vpack.c.b16 %v357, %v353
  %v478 = vpack.c.b16 %v362, %v358
  %v479 = vpack.c.b16 %v363, %v359
  %v480 = vpack.c.b16 %v364, %v360
  %v481 = vpack.c.b16 %v365, %v361
  %v482 = vpack.c.b16 %v370, %v366
  %v483 = vpack.c.b16 %v371, %v367
  %v484 = vpack.c.b16 %v372, %v368
  %v485 = vpack.c.b16 %v373, %v369
  %v486 = vpack.c.b16 %v378, %v374
  %v487 = vpack.c.b16 %v379, %v375
  %v488 = vpack.c.b16 %v380, %v376
  %v489 = vpack.c.b16 %v381, %v377
  %v490 = vpack.c.b16 %v386, %v382
  %v491 = vpack.c.b16 %v387, %v383
  %v492 = vpack.c.b16 %v388, %v384
  %v493 = vpack.c.b16 %v389, %v385
  %v494 = vpack.c.b16 %v394, %v390
  %v495 = vpack.c.b16 %v395, %v391
  %v496 = vpack.c.b16 %v396, %v392
  %v497 = vpack.c.b16 %v397, %v393
  %v498 = vpack.c.b16 %v402, %v398
  %v499 = vpack.c.b16 %v403, %v399
  %v500 = vpack.c.b16 %v404, %v400
  %v501 = vpack.c.b16 %v405, %v401
  %v502 = vpack.c.b16 %v410, %v406
  %v503 = vpack.c.b16 %v411, %v407
  %v504 = vpack.c.b16 %v412, %v408
  %v505 = vpack.c.b16 %v413, %v409
  %v506 = vpack.c.b16 %v418, %v414
  %v507 = vpack.c.b16 %v419, %v415
  %v508 = vpack.c.b16 %v420, %v416
  %v509 = vpack.c.b16 %v421, %v417
  %v510 = vpack.c.b16 %v426, %v422
  %v511 = vpack.c.b16 %v427, %v423
  %v512 = vpack.c.b16 %v428, %v424
  %v513 = vpack.c.b16 %v429, %v425
  %v514 = vpack.c.b16 %v434, %v430
  %v515 = vpack.c.b16 %v435, %v431
  %v516 = vpack.c.b16 %v436, %v432
  %v517 = vpack.c.b16 %v437, %v433
  %v518 = vpack.c.b16 %v442, %v438
  %v519 = vpack.c.b16 %v443, %v439
  %v520 = vpack.c.b16 %v444, %v440
  %v521 = vpack.c.b16 %v445, %v441
  %v522 = vpack.c.b16 %v450, %v446
  %v523 = vpack.c.b16 %v451, %v447
  %v524 = vpack.c.b16 %v452, %v448
  %v525 = vpack.c.b16 %v453, %v449
  %v526 = vpack.c.b16 %v458, %v454
  %v527 = vpack.c.b16 %v459, %v455
  %v528 = vpack.c.b16 %v460, %v456
  %v529 = vpack.c.b16 %v461, %v457
  %v530 = vpack.c.b16 %v466, %v462
  %v531 = vpack.c.b16 %v467, %v463
  %v532 = vpack.c.b16 %v468, %v464
  %v533 = vpack.c.b16 %v469, %v465
  %598 = vmatprep.subr.bf16.mxu0 %v499
  %599 = vmatpush1.bf16.msra.mxu0 %v498
  %600 = vmatprep.subr.bf16.mxu0 %v495
  %601 = vmatpush1.bf16.msra.mxu0 %v494
  %602 = vmatprep.subr.bf16.mxu0 %v491
  %603 = vmatpush1.bf16.msra.mxu0 %v490
  %604 = vmatprep.subr.bf16.mxu0 %v487
  %605 = vmatpush1.bf16.msra.mxu0 %v486
  %606 = vmatprep.subr.bf16.mxu0 %v483
  %607 = vmatpush1.bf16.msra.mxu0 %v482
  %608 = vmatprep.subr.bf16.mxu0 %v479
  %609 = vmatpush1.bf16.msra.mxu0 %v478
  %610 = vmatprep.subr.bf16.mxu0 %v475
  %611 = vmatpush1.bf16.msra.mxu0 %v474
  %612 = vmatprep.subr.bf16.mxu0 %v471
  %613 = vmatpush1.bf16.msra.mxu0 %v470
  %614 = vmatprep.subr.bf16.mxu0 %v531
  %615 = vmatpush2.bf16.msra.mxu0 %v530
  %616 = vmatprep.subr.bf16.mxu0 %v527
  %617 = vmatpush2.bf16.msra.mxu0 %v526
  %618 = vmatprep.subr.bf16.mxu0 %v523
  %619 = vmatpush2.bf16.msra.mxu0 %v522
  %620 = vmatprep.subr.bf16.mxu0 %v519
  %621 = vmatpush2.bf16.msra.mxu0 %v518
  %622 = vmatprep.subr.bf16.mxu0 %v515
  %623 = vmatpush2.bf16.msra.mxu0 %v514
  %624 = vmatprep.subr.bf16.mxu0 %v511
  %625 = vmatpush2.bf16.msra.mxu0 %v510
  %626 = vmatprep.subr.bf16.mxu0 %v507
  %627 = vmatpush2.bf16.msra.mxu0 %v506
  %628 = vmatprep.subr.bf16.mxu0 %v503
  %629 = vmatpush2.bf16.msra.mxu0 %v502
  %630 = vmatprep.mubr.bf16.mxu0 %v191
  %631 = vmatmul.mubr.bf16.gmra.mxu0 %v190
  %v632 = vpop.f32.mrf.mxu0
  %v633 = vadd.f32 %v261, %v632
  %v634 = vpop.f32.mrf.mxu0
  %v635 = vadd.f32 %v265, %v634
  %v636 = vpop.f32.mrf.mxu0
  %v637 = vadd.f32 %v261, %v636
  %v638 = vpop.f32.mrf.mxu0
  %v639 = vadd.f32 %v265, %v638
  %640 = vdwg.mxu0
  %641 = vmatprep.subr.bf16.mxu0 %v501
  %642 = vmatpush1.bf16.msra.mxu0 %v500
  %643 = vmatprep.subr.bf16.mxu0 %v497
  %644 = vmatpush1.bf16.msra.mxu0 %v496
  %645 = vmatprep.subr.bf16.mxu0 %v493
  %646 = vmatpush1.bf16.msra.mxu0 %v492
  %647 = vmatprep.subr.bf16.mxu0 %v489
  %648 = vmatpush1.bf16.msra.mxu0 %v488
  %649 = vmatprep.subr.bf16.mxu0 %v485
  %650 = vmatpush1.bf16.msra.mxu0 %v484
  %651 = vmatprep.subr.bf16.mxu0 %v481
  %652 = vmatpush1.bf16.msra.mxu0 %v480
  %653 = vmatprep.subr.bf16.mxu0 %v477
  %654 = vmatpush1.bf16.msra.mxu0 %v476
  %655 = vmatprep.subr.bf16.mxu0 %v473
  %656 = vmatpush1.bf16.msra.mxu0 %v472
  %657 = vmatprep.subr.bf16.mxu0 %v533
  %658 = vmatpush2.bf16.msra.mxu0 %v532
  %659 = vmatprep.subr.bf16.mxu0 %v529
  %660 = vmatpush2.bf16.msra.mxu0 %v528
  %661 = vmatprep.subr.bf16.mxu0 %v525
  %662 = vmatpush2.bf16.msra.mxu0 %v524
  %663 = vmatprep.subr.bf16.mxu0 %v521
  %664 = vmatpush2.bf16.msra.mxu0 %v520
  %665 = vmatprep.subr.bf16.mxu0 %v517
  %666 = vmatpush2.bf16.msra.mxu0 %v516
  %667 = vmatprep.subr.bf16.mxu0 %v513
  %668 = vmatpush2.bf16.msra.mxu0 %v512
  %669 = vmatprep.subr.bf16.mxu0 %v509
  %670 = vmatpush2.bf16.msra.mxu0 %v508
  %671 = vmatprep.subr.bf16.mxu0 %v505
  %672 = vmatpush2.bf16.msra.mxu0 %v504
  %673 = vmatprep.mubr.bf16.mxu0 %v191
  %674 = vmatmul.mubr.bf16.gmra.mxu0 %v190
  %v675 = vpop.f32.mrf.mxu0
  %v676 = vadd.f32 %v269, %v675
  %v677 = vpop.f32.mrf.mxu0
  %v678 = vadd.f32 %v273, %v677
  %v679 = vpop.f32.mrf.mxu0
  %v680 = vadd.f32 %v269, %v679
  %v681 = vpop.f32.mrf.mxu0
  %v682 = vadd.f32 %v273, %v681
  %683 = vdwg.mxu0
  %v684 = vmax.f32 %v633, 0.0
  %v685 = vmax.f32 %v635, 0.0
  %v686 = vmax.f32 %v676, 0.0
  %v687 = vmax.f32 %v678, 0.0
  %v688 = vmax.f32 %v637, 0.0
  %v689 = vmax.f32 %v639, 0.0
  %v690 = vmax.f32 %v680, 0.0
  %v691 = vmax.f32 %v682, 0.0
  %v692 = vpack.c.bf16 %v688, %v684
  %v693 = vpack.c.bf16 %v689, %v685
  %v694 = vpack.c.bf16 %v690, %v686
  %v695 = vpack.c.bf16 %v691, %v687
  %v696 = vld [vmem:[%s5] sm:$0xff]
  %v697 = vld [vmem:[%s5 + $0x1c] sm:$0xff]
  %v698 = vld [vmem:[%s5 + $0x38] sm:$0xff]
  %v699 = vld [vmem:[%s5 + $0x54] sm:$0xff]
  %v700 = vld [vmem:[%s5 + $0x70] sm:$0xff]
  %v701 = vld [vmem:[%s5 + $0x8c] sm:$0xff]
  %v702 = vld [vmem:[%s5 + $0xa8] sm:$0xff]
  %v703 = vld [vmem:[%s5 + $0xc4] sm:$0xff]
  %v704 = vld [vmem:[%s5 + $0xe0] sm:$0xff]
  %v705 = vld [vmem:[%s5 + $0xfc] sm:$0xff]
  %v706 = vld [vmem:[%s5 + $0x118] sm:$0xff]
  %v707 = vld [vmem:[%s5 + $0x134] sm:$0xff]
  %v708 = vld [vmem:[%s5 + $0x150] sm:$0xff]
  %v709 = vld [vmem:[%s5 + $0x16c] sm:$0xff]
  %v710 = vld [vmem:[%s5 + $0x188] sm:$0xff]
  %v711 = vld [vmem:[%s5 + $0x1a4] sm:$0xff]
  %v712 = vld [vmem:[%s5 + $0x1c0] sm:$0xff]
  %v713 = vld [vmem:[%s5 + $0x1dc] sm:$0xff]
  %v714 = vld [vmem:[%s5 + $0x1f8] sm:$0xff]
  %v715 = vld [vmem:[%s5 + $0x214] sm:$0xff]
  %v716 = vld [vmem:[%s5 + $0x230] sm:$0xff]
  %v717 = vld [vmem:[%s5 + $0x24c] sm:$0xff]
  %v718 = vld [vmem:[%s5 + $0x268] sm:$0xff]
  %v719 = vld [vmem:[%s5 + $0x284] sm:$0xff]
  %v720 = vld [vmem:[%s5 + $0x2a0] sm:$0xff]
  %v721 = vld [vmem:[%s5 + $0x2bc] sm:$0xff]
  %v722 = vld [vmem:[%s5 + $0x2d8] sm:$0xff]
  %v723 = vld [vmem:[%s5 + $0x2f4] sm:$0xff]
  %v724 = vld [vmem:[%s5 + $0x310] sm:$0xff]
  %v725 = vld [vmem:[%s5 + $0x32c] sm:$0xff]
  %v726 = vld [vmem:[%s5 + $0x348] sm:$0xff]
  %v727 = vld [vmem:[%s5 + $0x364] sm:$0xff]
  %v728 = vld [vmem:[%s5 + $0x380] sm:$0xff]
  %v729 = vld [vmem:[%s5 + $0x39c] sm:$0xff]
  %v730 = vld [vmem:[%s5 + $0x3b8] sm:$0xff]
  %v731 = vld [vmem:[%s5 + $0x3d4] sm:$0xff]
  %v732 = vld [vmem:[%s5 + $0x3f0] sm:$0xff]
  %v733 = vld [vmem:[%s5 + $0x40c] sm:$0xff]
  %v734 = vld [vmem:[%s5 + $0x428] sm:$0xff]
  %v735 = vld [vmem:[%s5 + $0x444] sm:$0xff]
  %v736 = vld [vmem:[%s5 + $0x460] sm:$0xff]
  %v737 = vld [vmem:[%s5 + $0x47c] sm:$0xff]
  %v738 = vld [vmem:[%s5 + $0x498] sm:$0xff]
  %v739 = vld [vmem:[%s5 + $0x4b4] sm:$0xff]
  %v740 = vld [vmem:[%s5 + $0x4d0] sm:$0xff]
  %v741 = vld [vmem:[%s5 + $0x4ec] sm:$0xff]
  %v742 = vld [vmem:[%s5 + $0x508] sm:$0xff]
  %v743 = vld [vmem:[%s5 + $0x524] sm:$0xff]
  %v744 = vld [vmem:[%s5 + $0x540] sm:$0xff]
  %v745 = vld [vmem:[%s5 + $0x55c] sm:$0xff]
  %v746 = vld [vmem:[%s5 + $0x578] sm:$0xff]
  %v747 = vld [vmem:[%s5 + $0x594] sm:$0xff]
  %v748 = vld [vmem:[%s5 + $0x5b0] sm:$0xff]
  %v749 = vld [vmem:[%s5 + $0x5cc] sm:$0xff]
  %v750 = vld [vmem:[%s5 + $0x5e8] sm:$0xff]
  %v751 = vld [vmem:[%s5 + $0x604] sm:$0xff]
  %v752 = vld [vmem:[%s5 + $0x620] sm:$0xff]
  %v753 = vld [vmem:[%s5 + $0x63c] sm:$0xff]
  %v754 = vld [vmem:[%s5 + $0x658] sm:$0xff]
  %v755 = vld [vmem:[%s5 + $0x674] sm:$0xff]
  %v756 = vld [vmem:[%s5 + $0x690] sm:$0xff]
  %v757 = vld [vmem:[%s5 + $0x6ac] sm:$0xff]
  %v758 = vld [vmem:[%s5 + $0x6c8] sm:$0xff]
  %v759 = vld [vmem:[%s5 + $0x6e4] sm:$0xff]
  %v760 = vld [vmem:[%s6] sm:$0x3]
  %v762 = vlaneseq
  %v763 = vshrl.u32 %v762, 7
  %v764 = vsub.s32 0, %v763
  %v765 = vrot.slane %v760, %v764
  %v766 = vlaneseq
  %v767 = vshrl.u32 %v766, 7
  %v768 = vsub.s32 1, %v767
  %v769 = vrot.slane %v760, %v768
  %v836 = vunpack.c.l.b16 %v696
  %v837 = vunpack.c.h.b16 %v696
  %v838 = vunpack.c.l.b16 %v697
  %v839 = vunpack.c.h.b16 %v697
  %v840 = vunpack.c.l.b16 %v698
  %v841 = vunpack.c.h.b16 %v698
  %v842 = vunpack.c.l.b16 %v699
  %v843 = vunpack.c.h.b16 %v699
  %v844 = vunpack.c.l.b16 %v700
  %v845 = vunpack.c.h.b16 %v700
  %v846 = vunpack.c.l.b16 %v701
  %v847 = vunpack.c.h.b16 %v701
  %v848 = vunpack.c.l.b16 %v702
  %v849 = vunpack.c.h.b16 %v702
  %v850 = vunpack.c.l.b16 %v703
  %v851 = vunpack.c.h.b16 %v703
  %v852 = vunpack.c.l.b16 %v704
  %v853 = vunpack.c.h.b16 %v704
  %v854 = vunpack.c.l.b16 %v705
  %v855 = vunpack.c.h.b16 %v705
  %v856 = vunpack.c.l.b16 %v706
  %v857 = vunpack.c.h.b16 %v706
  %v858 = vunpack.c.l.b16 %v707
  %v859 = vunpack.c.h.b16 %v707
  %v860 = vunpack.c.l.b16 %v708
  %v861 = vunpack.c.h.b16 %v708
  %v862 = vunpack.c.l.b16 %v709
  %v863 = vunpack.c.h.b16 %v709
  %v864 = vunpack.c.l.b16 %v710
  %v865 = vunpack.c.h.b16 %v710
  %v866 = vunpack.c.l.b16 %v711
  %v867 = vunpack.c.h.b16 %v711
  %v868 = vunpack.c.l.b16 %v712
  %v869 = vunpack.c.h.b16 %v712
  %v870 = vunpack.c.l.b16 %v713
  %v871 = vunpack.c.h.b16 %v713
  %v872 = vunpack.c.l.b16 %v714
  %v873 = vunpack.c.h.b16 %v714
  %v874 = vunpack.c.l.b16 %v715
  %v875 = vunpack.c.h.b16 %v715
  %v876 = vunpack.c.l.b16 %v716
  %v877 = vunpack.c.h.b16 %v716
  %v878 = vunpack.c.l.b16 %v717
  %v879 = vunpack.c.h.b16 %v717
  %v880 = vunpack.c.l.b16 %v718
  %v881 = vunpack.c.h.b16 %v718
  %v882 = vunpack.c.l.b16 %v719
  %v883 = vunpack.c.h.b16 %v719
  %v884 = vunpack.c.l.b16 %v720
  %v885 = vunpack.c.h.b16 %v720
  %v886 = vunpack.c.l.b16 %v721
  %v887 = vunpack.c.h.b16 %v721
  %v888 = vunpack.c.l.b16 %v722
  %v889 = vunpack.c.h.b16 %v722
  %v890 = vunpack.c.l.b16 %v723
  %v891 = vunpack.c.h.b16 %v723
  %v892 = vunpack.c.l.b16 %v724
  %v893 = vunpack.c.h.b16 %v724
  %v894 = vunpack.c.l.b16 %v725
  %v895 = vunpack.c.h.b16 %v725
  %v896 = vunpack.c.l.b16 %v726
  %v897 = vunpack.c.h.b16 %v726
  %v898 = vunpack.c.l.b16 %v727
  %v899 = vunpack.c.h.b16 %v727
  %v900 = vunpack.c.l.b16 %v728
  %v901 = vunpack.c.h.b16 %v728
  %v902 = vunpack.c.l.b16 %v729
  %v903 = vunpack.c.h.b16 %v729
  %v904 = vunpack.c.l.b16 %v730
  %v905 = vunpack.c.h.b16 %v730
  %v906 = vunpack.c.l.b16 %v731
  %v907 = vunpack.c.h.b16 %v731
  %v908 = vunpack.c.l.b16 %v732
  %v909 = vunpack.c.h.b16 %v732
  %v910 = vunpack.c.l.b16 %v733
  %v911 = vunpack.c.h.b16 %v733
  %v912 = vunpack.c.l.b16 %v734
  %v913 = vunpack.c.h.b16 %v734
  %v914 = vunpack.c.l.b16 %v735
  %v915 = vunpack.c.h.b16 %v735
  %v916 = vunpack.c.l.b16 %v736
  %v917 = vunpack.c.h.b16 %v736
  %v918 = vunpack.c.l.b16 %v737
  %v919 = vunpack.c.h.b16 %v737
  %v920 = vunpack.c.l.b16 %v738
  %v921 = vunpack.c.h.b16 %v738
  %v922 = vunpack.c.l.b16 %v739
  %v923 = vunpack.c.h.b16 %v739
  %v924 = vunpack.c.l.b16 %v740
  %v925 = vunpack.c.h.b16 %v740
  %v926 = vunpack.c.l.b16 %v741
  %v927 = vunpack.c.h.b16 %v741
  %v928 = vunpack.c.l.b16 %v742
  %v929 = vunpack.c.h.b16 %v742
  %v930 = vunpack.c.l.b16 %v743
  %v931 = vunpack.c.h.b16 %v743
  %v932 = vunpack.c.l.b16 %v744
  %v933 = vunpack.c.h.b16 %v744
  %v934 = vunpack.c.l.b16 %v745
  %v935 = vunpack.c.h.b16 %v745
  %v936 = vunpack.c.l.b16 %v746
  %v937 = vunpack.c.h.b16 %v746
  %v938 = vunpack.c.l.b16 %v747
  %v939 = vunpack.c.h.b16 %v747
  %v940 = vunpack.c.l.b16 %v748
  %v941 = vunpack.c.h.b16 %v748
  %v942 = vunpack.c.l.b16 %v749
  %v943 = vunpack.c.h.b16 %v749
  %v944 = vunpack.c.l.b16 %v750
  %v945 = vunpack.c.h.b16 %v750
  %v946 = vunpack.c.l.b16 %v751
  %v947 = vunpack.c.h.b16 %v751
  %v948 = vunpack.c.l.b16 %v752
  %v949 = vunpack.c.h.b16 %v752
  %v950 = vunpack.c.l.b16 %v753
  %v951 = vunpack.c.h.b16 %v753
  %v952 = vunpack.c.l.b16 %v754
  %v953 = vunpack.c.h.b16 %v754
  %v954 = vunpack.c.l.b16 %v755
  %v955 = vunpack.c.h.b16 %v755
  %v956 = vunpack.c.l.b16 %v756
  %v957 = vunpack.c.h.b16 %v756
  %v958 = vunpack.c.l.b16 %v757
  %v959 = vunpack.c.h.b16 %v757
  %v960 = vunpack.c.l.b16 %v758
  %v961 = vunpack.c.h.b16 %v758
  %v962 = vunpack.c.l.b16 %v759
  %v963 = vunpack.c.h.b16 %v759
  %v964 = vpack.c.b16 %v838, %v836
  %v965 = vpack.c.b16 %v839, %v837
  %v966 = vpack.c.b16 %v842, %v840
  %v967 = vpack.c.b16 %v843, %v841
  %v968 = vpack.c.b16 %v846, %v844
  %v969 = vpack.c.b16 %v847, %v845
  %v970 = vpack.c.b16 %v850, %v848
  %v971 = vpack.c.b16 %v851, %v849
  %v972 = vpack.c.b16 %v854, %v852
  %v973 = vpack.c.b16 %v855, %v853
  %v974 = vpack.c.b16 %v858, %v856
  %v975 = vpack.c.b16 %v859, %v857
  %v976 = vpack.c.b16 %v862, %v860
  %v977 = vpack.c.b16 %v863, %v861
  %v978 = vpack.c.b16 %v866, %v864
  %v979 = vpack.c.b16 %v867, %v865
  %v980 = vpack.c.b16 %v870, %v868
  %v981 = vpack.c.b16 %v871, %v869
  %v982 = vpack.c.b16 %v874, %v872
  %v983 = vpack.c.b16 %v875, %v873
  %v984 = vpack.c.b16 %v878, %v876
  %v985 = vpack.c.b16 %v879, %v877
  %v986 = vpack.c.b16 %v882, %v880
  %v987 = vpack.c.b16 %v883, %v881
  %v988 = vpack.c.b16 %v886, %v884
  %v989 = vpack.c.b16 %v887, %v885
  %v990 = vpack.c.b16 %v890, %v888
  %v991 = vpack.c.b16 %v891, %v889
  %v992 = vpack.c.b16 %v894, %v892
  %v993 = vpack.c.b16 %v895, %v893
  %v994 = vpack.c.b16 %v898, %v896
  %v995 = vpack.c.b16 %v899, %v897
  %v996 = vpack.c.b16 %v902, %v900
  %v997 = vpack.c.b16 %v903, %v901
  %v998 = vpack.c.b16 %v906, %v904
  %v999 = vpack.c.b16 %v907, %v905
  %v1000 = vpack.c.b16 %v910, %v908
  %v1001 = vpack.c.b16 %v911, %v909
  %v1002 = vpack.c.b16 %v914, %v912
  %v1003 = vpack.c.b16 %v915, %v913
  %v1004 = vpack.c.b16 %v918, %v916
  %v1005 = vpack.c.b16 %v919, %v917
  %v1006 = vpack.c.b16 %v922, %v920
  %v1007 = vpack.c.b16 %v923, %v921
  %v1008 = vpack.c.b16 %v926, %v924
  %v1009 = vpack.c.b16 %v927, %v925
  %v1010 = vpack.c.b16 %v930, %v928
  %v1011 = vpack.c.b16 %v931, %v929
  %v1012 = vpack.c.b16 %v934, %v932
  %v1013 = vpack.c.b16 %v935, %v933
  %v1014 = vpack.c.b16 %v938, %v936
  %v1015 = vpack.c.b16 %v939, %v937
  %v1016 = vpack.c.b16 %v942, %v940
  %v1017 = vpack.c.b16 %v943, %v941
  %v1018 = vpack.c.b16 %v946, %v944
  %v1019 = vpack.c.b16 %v947, %v945
  %v1020 = vpack.c.b16 %v950, %v948
  %v1021 = vpack.c.b16 %v951, %v949
  %v1022 = vpack.c.b16 %v954, %v952
  %v1023 = vpack.c.b16 %v955, %v953
  %v1024 = vpack.c.b16 %v958, %v956
  %v1025 = vpack.c.b16 %v959, %v957
  %v1026 = vpack.c.b16 %v962, %v960
  %v1027 = vpack.c.b16 %v963, %v961
  %1092 = vmatprep.subr.bf16.mxu0 %v979
  %1093 = vmatpush1.bf16.msra.mxu0 %v978
  %1094 = vmatprep.subr.bf16.mxu0 %v977
  %1095 = vmatpush1.bf16.msra.mxu0 %v976
  %1096 = vmatprep.subr.bf16.mxu0 %v975
  %1097 = vmatpush1.bf16.msra.mxu0 %v974
  %1098 = vmatprep.subr.bf16.mxu0 %v973
  %1099 = vmatpush1.bf16.msra.mxu0 %v972
  %1100 = vmatprep.subr.bf16.mxu0 %v971
  %1101 = vmatpush1.bf16.msra.mxu0 %v970
  %1102 = vmatprep.subr.bf16.mxu0 %v969
  %1103 = vmatpush1.bf16.msra.mxu0 %v968
  %1104 = vmatprep.subr.bf16.mxu0 %v967
  %1105 = vmatpush1.bf16.msra.mxu0 %v966
  %1106 = vmatprep.subr.bf16.mxu0 %v965
  %1107 = vmatpush1.bf16.msra.mxu0 %v964
  %1108 = vmatprep.subr.bf16.mxu0 %v995
  %1109 = vmatpush2.bf16.msra.mxu0 %v994
  %1110 = vmatprep.subr.bf16.mxu0 %v993
  %1111 = vmatpush2.bf16.msra.mxu0 %v992
  %1112 = vmatprep.subr.bf16.mxu0 %v991
  %1113 = vmatpush2.bf16.msra.mxu0 %v990
  %1114 = vmatprep.subr.bf16.mxu0 %v989
  %1115 = vmatpush2.bf16.msra.mxu0 %v988
  %1116 = vmatprep.subr.bf16.mxu0 %v987
  %1117 = vmatpush2.bf16.msra.mxu0 %v986
  %1118 = vmatprep.subr.bf16.mxu0 %v985
  %1119 = vmatpush2.bf16.msra.mxu0 %v984
  %1120 = vmatprep.subr.bf16.mxu0 %v983
  %1121 = vmatpush2.bf16.msra.mxu0 %v982
  %1122 = vmatprep.subr.bf16.mxu0 %v981
  %1123 = vmatpush2.bf16.msra.mxu0 %v980
  %1124 = vmatprep.mubr.bf16.mxu0 %v693
  %1125 = vmatmul.mubr.bf16.gmra.mxu0 %v692
  %v1126 = vpop.f32.mrf.mxu0
  %v1127 = vadd.f32 %v765, %v1126
  %v1128 = vpop.f32.mrf.mxu0
  %v1129 = vadd.f32 %v769, %v1128
  %v1130 = vpop.f32.mrf.mxu0
  %v1131 = vadd.f32 %v765, %v1130
  %v1132 = vpop.f32.mrf.mxu0
  %v1133 = vadd.f32 %v769, %v1132
  %1134 = vdwg.mxu0
  %1135 = vmatprep.subr.bf16.mxu0 %v1011
  %1136 = vmatpush1.bf16.msra.mxu0 %v1010
  %1137 = vmatprep.subr.bf16.mxu0 %v1009
  %1138 = vmatpush1.bf16.msra.mxu0 %v1008
  %1139 = vmatprep.subr.bf16.mxu0 %v1007
  %1140 = vmatpush1.bf16.msra.mxu0 %v1006
  %1141 = vmatprep.subr.bf16.mxu0 %v1005
  %1142 = vmatpush1.bf16.msra.mxu0 %v1004
  %1143 = vmatprep.subr.bf16.mxu0 %v1003
  %1144 = vmatpush1.bf16.msra.mxu0 %v1002
  %1145 = vmatprep.subr.bf16.mxu0 %v1001
  %1146 = vmatpush1.bf16.msra.mxu0 %v1000
  %1147 = vmatprep.subr.bf16.mxu0 %v999
  %1148 = vmatpush1.bf16.msra.mxu0 %v998
  %1149 = vmatprep.subr.bf16.mxu0 %v997
  %1150 = vmatpush1.bf16.msra.mxu0 %v996
  %1151 = vmatprep.subr.bf16.mxu0 %v1027
  %1152 = vmatpush2.bf16.msra.mxu0 %v1026
  %1153 = vmatprep.subr.bf16.mxu0 %v1025
  %1154 = vmatpush2.bf16.msra.mxu0 %v1024
  %1155 = vmatprep.subr.bf16.mxu0 %v1023
  %1156 = vmatpush2.bf16.msra.mxu0 %v1022
  %1157 = vmatprep.subr.bf16.mxu0 %v1021
  %1158 = vmatpush2.bf16.msra.mxu0 %v1020
  %1159 = vmatprep.subr.bf16.mxu0 %v1019
  %1160 = vmatpush2.bf16.msra.mxu0 %v1018
  %1161 = vmatprep.subr.bf16.mxu0 %v1017
  %1162 = vmatpush2.bf16.msra.mxu0 %v1016
  %1163 = vmatprep.subr.bf16.mxu0 %v1015
  %1164 = vmatpush2.bf16.msra.mxu0 %v1014
  %1165 = vmatprep.subr.bf16.mxu0 %v1013
  %1166 = vmatpush2.bf16.msra.mxu0 %v1012
  %1167 = vmatprep.mubr.bf16.mxu0 %v695
  %1168 = vmatmul.mubr.bf16.gmra.mxu0 %v694
  %v1169 = vpop.f32.mrf.mxu0
  %v1170 = vadd.f32 %v1127, %v1169
  %v1171 = vpop.f32.mrf.mxu0
  %v1172 = vadd.f32 %v1129, %v1171
  %v1173 = vpop.f32.mrf.mxu0
  %v1174 = vadd.f32 %v1131, %v1173
  %v1175 = vpop.f32.mrf.mxu0
  %v1176 = vadd.f32 %v1133, %v1175
  %1177 = vdwg.mxu0
  %v1178 = vtanh.pop %v1170
  %v1179 = vtanh.pop %v1172
  %v1180 = vtanh.pop %v1174
  %v1181 = vtanh.pop %v1176
  %1182 = vst [vmem:[%s7] sm:$0xff] %v1178
  %1183 = vst [vmem:[%s7 + $0x8] sm:$0xff] %v1179
  %1184 = vst [vmem:[%s7 + $0x38] sm:$0xff] %v1180
  %1185 = vst [vmem:[%s7 + $0x40] sm:$0xff] %v1181
  %v1186 = vld [vmem:[%s5 + $0x8] sm:$0xff]
  %v1187 = vld [vmem:[%s5 + $0x24] sm:$0xff]
  %v1188 = vld [vmem:[%s5 + $0x40] sm:$0xff]
  %v1189 = vld [vmem:[%s5 + $0x5c] sm:$0xff]
  %v1190 = vld [vmem:[%s5 + $0x78] sm:$0xff]
  %v1191 = vld [vmem:[%s5 + $0x94] sm:$0xff]
  %v1192 = vld [vmem:[%s5 + $0xb0] sm:$0xff]
  %v1193 = vld [vmem:[%s5 + $0xcc] sm:$0xff]
  %v1194 = vld [vmem:[%s5 + $0xe8] sm:$0xff]
  %v1195 = vld [vmem:[%s5 + $0x104] sm:$0xff]
  %v1196 = vld [vmem:[%s5 + $0x120] sm:$0xff]
  %v1197 = vld [vmem:[%s5 + $0x13c] sm:$0xff]
  %v1198 = vld [vmem:[%s5 + $0x158] sm:$0xff]
  %v1199 = vld [vmem:[%s5 + $0x174] sm:$0xff]
  %v1200 = vld [vmem:[%s5 + $0x190] sm:$0xff]
  %v1201 = vld [vmem:[%s5 + $0x1ac] sm:$0xff]
  %v1202 = vld [vmem:[%s5 + $0x1c8] sm:$0xff]
  %v1203 = vld [vmem:[%s5 + $0x1e4] sm:$0xff]
  %v1204 = vld [vmem:[%s5 + $0x200] sm:$0xff]
  %v1205 = vld [vmem:[%s5 + $0x21c] sm:$0xff]
  %v1206 = vld [vmem:[%s5 + $0x238] sm:$0xff]
  %v1207 = vld [vmem:[%s5 + $0x254] sm:$0xff]
  %v1208 = vld [vmem:[%s5 + $0x270] sm:$0xff]
  %v1209 = vld [vmem:[%s5 + $0x28c] sm:$0xff]
  %v1210 = vld [vmem:[%s5 + $0x2a8] sm:$0xff]
  %v1211 = vld [vmem:[%s5 + $0x2c4] sm:$0xff]
  %v1212 = vld [vmem:[%s5 + $0x2e0] sm:$0xff]
  %v1213 = vld [vmem:[%s5 + $0x2fc] sm:$0xff]
  %v1214 = vld [vmem:[%s5 + $0x318] sm:$0xff]
  %v1215 = vld [vmem:[%s5 + $0x334] sm:$0xff]
  %v1216 = vld [vmem:[%s5 + $0x350] sm:$0xff]
  %v1217 = vld [vmem:[%s5 + $0x36c] sm:$0xff]
  %v1218 = vld [vmem:[%s5 + $0x388] sm:$0xff]
  %v1219 = vld [vmem:[%s5 + $0x3a4] sm:$0xff]
  %v1220 = vld [vmem:[%s5 + $0x3c0] sm:$0xff]
  %v1221 = vld [vmem:[%s5 + $0x3dc] sm:$0xff]
  %v1222 = vld [vmem:[%s5 + $0x3f8] sm:$0xff]
  %v1223 = vld [vmem:[%s5 + $0x414] sm:$0xff]
  %v1224 = vld [vmem:[%s5 + $0x430] sm:$0xff]
  %v1225 = vld [vmem:[%s5 + $0x44c] sm:$0xff]
  %v1226 = vld [vmem:[%s5 + $0x468] sm:$0xff]
  %v1227 = vld [vmem:[%s5 + $0x484] sm:$0xff]
  %v1228 = vld [vmem:[%s5 + $0x4a0] sm:$0xff]
  %v1229 = vld [vmem:[%s5 + $0x4bc] sm:$0xff]
  %v1230 = vld [vmem:[%s5 + $0x4d8] sm:$0xff]
  %v1231 = vld [vmem:[%s5 + $0x4f4] sm:$0xff]
  %v1232 = vld [vmem:[%s5 + $0x510] sm:$0xff]
  %v1233 = vld [vmem:[%s5 + $0x52c] sm:$0xff]
  %v1234 = vld [vmem:[%s5 + $0x548] sm:$0xff]
  %v1235 = vld [vmem:[%s5 + $0x564] sm:$0xff]
  %v1236 = vld [vmem:[%s5 + $0x580] sm:$0xff]
  %v1237 = vld [vmem:[%s5 + $0x59c] sm:$0xff]
  %v1238 = vld [vmem:[%s5 + $0x5b8] sm:$0xff]
  %v1239 = vld [vmem:[%s5 + $0x5d4] sm:$0xff]
  %v1240 = vld [vmem:[%s5 + $0x5f0] sm:$0xff]
  %v1241 = vld [vmem:[%s5 + $0x60c] sm:$0xff]
  %v1242 = vld [vmem:[%s5 + $0x628] sm:$0xff]
  %v1243 = vld [vmem:[%s5 + $0x644] sm:$0xff]
  %v1244 = vld [vmem:[%s5 + $0x660] sm:$0xff]
  %v1245 = vld [vmem:[%s5 + $0x67c] sm:$0xff]
  %v1246 = vld [vmem:[%s5 + $0x698] sm:$0xff]
  %v1247 = vld [vmem:[%s5 + $0x6b4] sm:$0xff]
  %v1248 = vld [vmem:[%s5 + $0x6d0] sm:$0xff]
  %v1249 = vld [vmem:[%s5 + $0x6ec] sm:$0xff]
  %v1250 = vld [vmem:[%s6 + $0x2] sm:$0x3]
  %v1252 = vlaneseq
  %v1253 = vshrl.u32 %v1252, 7
  %v1254 = vsub.s32 0, %v1253
  %v1255 = vrot.slane %v1250, %v1254
  %v1256 = vlaneseq
  %v1257 = vshrl.u32 %v1256, 7
  %v1258 = vsub.s32 1, %v1257
  %v1259 = vrot.slane %v1250, %v1258
  %v1326 = vunpack.c.l.b16 %v1186
  %v1327 = vunpack.c.h.b16 %v1186
  %v1328 = vunpack.c.l.b16 %v1187
  %v1329 = vunpack.c.h.b16 %v1187
  %v1330 = vunpack.c.l.b16 %v1188
  %v1331 = vunpack.c.h.b16 %v1188
  %v1332 = vunpack.c.l.b16 %v1189
  %v1333 = vunpack.c.h.b16 %v1189
  %v1334 = vunpack.c.l.b16 %v1190
  %v1335 = vunpack.c.h.b16 %v1190
  %v1336 = vunpack.c.l.b16 %v1191
  %v1337 = vunpack.c.h.b16 %v1191
  %v1338 = vunpack.c.l.b16 %v1192
  %v1339 = vunpack.c.h.b16 %v1192
  %v1340 = vunpack.c.l.b16 %v1193
  %v1341 = vunpack.c.h.b16 %v1193
  %v1342 = vunpack.c.l.b16 %v1194
  %v1343 = vunpack.c.h.b16 %v1194
  %v1344 = vunpack.c.l.b16 %v1195
  %v1345 = vunpack.c.h.b16 %v1195
  %v1346 = vunpack.c.l.b16 %v1196
  %v1347 = vunpack.c.h.b16 %v1196
  %v1348 = vunpack.c.l.b16 %v1197
  %v1349 = vunpack.c.h.b16 %v1197
  %v1350 = vunpack.c.l.b16 %v1198
  %v1351 = vunpack.c.h.b16 %v1198
  %v1352 = vunpack.c.l.b16 %v1199
  %v1353 = vunpack.c.h.b16 %v1199
  %v1354 = vunpack.c.l.b16 %v1200
  %v1355 = vunpack.c.h.b16 %v1200
  %v1356 = vunpack.c.l.b16 %v1201
  %v1357 = vunpack.c.h.b16 %v1201
  %v1358 = vunpack.c.l.b16 %v1202
  %v1359 = vunpack.c.h.b16 %v1202
  %v1360 = vunpack.c.l.b16 %v1203
  %v1361 = vunpack.c.h.b16 %v1203
  %v1362 = vunpack.c.l.b16 %v1204
  %v1363 = vunpack.c.h.b16 %v1204
  %v1364 = vunpack.c.l.b16 %v1205
  %v1365 = vunpack.c.h.b16 %v1205
  %v1366 = vunpack.c.l.b16 %v1206
  %v1367 = vunpack.c.h.b16 %v1206
  %v1368 = vunpack.c.l.b16 %v1207
  %v1369 = vunpack.c.h.b16 %v1207
  %v1370 = vunpack.c.l.b16 %v1208
  %v1371 = vunpack.c.h.b16 %v1208
  %v1372 = vunpack.c.l.b16 %v1209
  %v1373 = vunpack.c.h.b16 %v1209
  %v1374 = vunpack.c.l.b16 %v1210
  %v1375 = vunpack.c.h.b16 %v1210
  %v1376 = vunpack.c.l.b16 %v1211
  %v1377 = vunpack.c.h.b16 %v1211
  %v1378 = vunpack.c.l.b16 %v1212
  %v1379 = vunpack.c.h.b16 %v1212
  %v1380 = vunpack.c.l.b16 %v1213
  %v1381 = vunpack.c.h.b16 %v1213
  %v1382 = vunpack.c.l.b16 %v1214
  %v1383 = vunpack.c.h.b16 %v1214
  %v1384 = vunpack.c.l.b16 %v1215
  %v1385 = vunpack.c.h.b16 %v1215
  %v1386 = vunpack.c.l.b16 %v1216
  %v1387 = vunpack.c.h.b16 %v1216
  %v1388 = vunpack.c.l.b16 %v1217
  %v1389 = vunpack.c.h.b16 %v1217
  %v1390 = vunpack.c.l.b16 %v1218
  %v1391 = vunpack.c.h.b16 %v1218
  %v1392 = vunpack.c.l.b16 %v1219
  %v1393 = vunpack.c.h.b16 %v1219
  %v1394 = vunpack.c.l.b16 %v1220
  %v1395 = vunpack.c.h.b16 %v1220
  %v1396 = vunpack.c.l.b16 %v1221
  %v1397 = vunpack.c.h.b16 %v1221
  %v1398 = vunpack.c.l.b16 %v1222
  %v1399 = vunpack.c.h.b16 %v1222
  %v1400 = vunpack.c.l.b16 %v1223
  %v1401 = vunpack.c.h.b16 %v1223
  %v1402 = vunpack.c.l.b16 %v1224
  %v1403 = vunpack.c.h.b16 %v1224
  %v1404 = vunpack.c.l.b16 %v1225
  %v1405 = vunpack.c.h.b16 %v1225
  %v1406 = vunpack.c.l.b16 %v1226
  %v1407 = vunpack.c.h.b16 %v1226
  %v1408 = vunpack.c.l.b16 %v1227
  %v1409 = vunpack.c.h.b16 %v1227
  %v1410 = vunpack.c.l.b16 %v1228
  %v1411 = vunpack.c.h.b16 %v1228
  %v1412 = vunpack.c.l.b16 %v1229
  %v1413 = vunpack.c.h.b16 %v1229
  %v1414 = vunpack.c.l.b16 %v1230
  %v1415 = vunpack.c.h.b16 %v1230
  %v1416 = vunpack.c.l.b16 %v1231
  %v1417 = vunpack.c.h.b16 %v1231
  %v1418 = vunpack.c.l.b16 %v1232
  %v1419 = vunpack.c.h.b16 %v1232
  %v1420 = vunpack.c.l.b16 %v1233
  %v1421 = vunpack.c.h.b16 %v1233
  %v1422 = vunpack.c.l.b16 %v1234
  %v1423 = vunpack.c.h.b16 %v1234
  %v1424 = vunpack.c.l.b16 %v1235
  %v1425 = vunpack.c.h.b16 %v1235
  %v1426 = vunpack.c.l.b16 %v1236
  %v1427 = vunpack.c.h.b16 %v1236
  %v1428 = vunpack.c.l.b16 %v1237
  %v1429 = vunpack.c.h.b16 %v1237
  %v1430 = vunpack.c.l.b16 %v1238
  %v1431 = vunpack.c.h.b16 %v1238
  %v1432 = vunpack.c.l.b16 %v1239
  %v1433 = vunpack.c.h.b16 %v1239
  %v1434 = vunpack.c.l.b16 %v1240
  %v1435 = vunpack.c.h.b16 %v1240
  %v1436 = vunpack.c.l.b16 %v1241
  %v1437 = vunpack.c.h.b16 %v1241
  %v1438 = vunpack.c.l.b16 %v1242
  %v1439 = vunpack.c.h.b16 %v1242
  %v1440 = vunpack.c.l.b16 %v1243
  %v1441 = vunpack.c.h.b16 %v1243
  %v1442 = vunpack.c.l.b16 %v1244
  %v1443 = vunpack.c.h.b16 %v1244
  %v1444 = vunpack.c.l.b16 %v1245
  %v1445 = vunpack.c.h.b16 %v1245
  %v1446 = vunpack.c.l.b16 %v1246
  %v1447 = vunpack.c.h.b16 %v1246
  %v1448 = vunpack.c.l.b16 %v1247
  %v1449 = vunpack.c.h.b16 %v1247
  %v1450 = vunpack.c.l.b16 %v1248
  %v1451 = vunpack.c.h.b16 %v1248
  %v1452 = vunpack.c.l.b16 %v1249
  %v1453 = vunpack.c.h.b16 %v1249
  %v1454 = vpack.c.b16 %v1328, %v1326
  %v1455 = vpack.c.b16 %v1329, %v1327
  %v1456 = vpack.c.b16 %v1332, %v1330
  %v1457 = vpack.c.b16 %v1333, %v1331
  %v1458 = vpack.c.b16 %v1336, %v1334
  %v1459 = vpack.c.b16 %v1337, %v1335
  %v1460 = vpack.c.b16 %v1340, %v1338
  %v1461 = vpack.c.b16 %v1341, %v1339
  %v1462 = vpack.c.b16 %v1344, %v1342
  %v1463 = vpack.c.b16 %v1345, %v1343
  %v1464 = vpack.c.b16 %v1348, %v1346
  %v1465 = vpack.c.b16 %v1349, %v1347
  %v1466 = vpack.c.b16 %v1352, %v1350
  %v1467 = vpack.c.b16 %v1353, %v1351
  %v1468 = vpack.c.b16 %v1356, %v1354
  %v1469 = vpack.c.b16 %v1357, %v1355
  %v1470 = vpack.c.b16 %v1360, %v1358
  %v1471 = vpack.c.b16 %v1361, %v1359
  %v1472 = vpack.c.b16 %v1364, %v1362
  %v1473 = vpack.c.b16 %v1365, %v1363
  %v1474 = vpack.c.b16 %v1368, %v1366
  %v1475 = vpack.c.b16 %v1369, %v1367
  %v1476 = vpack.c.b16 %v1372, %v1370
  %v1477 = vpack.c.b16 %v1373, %v1371
  %v1478 = vpack.c.b16 %v1376, %v1374
  %v1479 = vpack.c.b16 %v1377, %v1375
  %v1480 = vpack.c.b16 %v1380, %v1378
  %v1481 = vpack.c.b16 %v1381, %v1379
  %v1482 = vpack.c.b16 %v1384, %v1382
  %v1483 = vpack.c.b16 %v1385, %v1383
  %v1484 = vpack.c.b16 %v1388, %v1386
  %v1485 = vpack.c.b16 %v1389, %v1387
  %v1486 = vpack.c.b16 %v1392, %v1390
  %v1487 = vpack.c.b16 %v1393, %v1391
  %v1488 = vpack.c.b16 %v1396, %v1394
  %v1489 = vpack.c.b16 %v1397, %v1395
  %v1490 = vpack.c.b16 %v1400, %v1398
  %v1491 = vpack.c.b16 %v1401, %v1399
  %v1492 = vpack.c.b16 %v1404, %v1402
  %v1493 = vpack.c.b16 %v1405, %v1403
  %v1494 = vpack.c.b16 %v1408, %v1406
  %v1495 = vpack.c.b16 %v1409, %v1407
  %v1496 = vpack.c.b16 %v1412, %v1410
  %v1497 = vpack.c.b16 %v1413, %v1411
  %v1498 = vpack.c.b16 %v1416, %v1414
  %v1499 = vpack.c.b16 %v1417, %v1415
  %v1500 = vpack.c.b16 %v1420, %v1418
  %v1501 = vpack.c.b16 %v1421, %v1419
  %v1502 = vpack.c.b16 %v1424, %v1422
  %v1503 = vpack.c.b16 %v1425, %v1423
  %v1504 = vpack.c.b16 %v1428, %v1426
  %v1505 = vpack.c.b16 %v1429, %v1427
  %v1506 = vpack.c.b16 %v1432, %v1430
  %v1507 = vpack.c.b16 %v1433, %v1431
  %v1508 = vpack.c.b16 %v1436, %v1434
  %v1509 = vpack.c.b16 %v1437, %v1435
  %v1510 = vpack.c.b16 %v1440, %v1438
  %v1511 = vpack.c.b16 %v1441, %v1439
  %v1512 = vpack.c.b16 %v1444, %v1442
  %v1513 = vpack.c.b16 %v1445, %v1443
  %v1514 = vpack.c.b16 %v1448, %v1446
  %v1515 = vpack.c.b16 %v1449, %v1447
  %v1516 = vpack.c.b16 %v1452, %v1450
  %v1517 = vpack.c.b16 %v1453, %v1451
  %1582 = vmatprep.subr.bf16.mxu0 %v1469
  %1583 = vmatpush1.bf16.msra.mxu0 %v1468
  %1584 = vmatprep.subr.bf16.mxu0 %v1467
  %1585 = vmatpush1.bf16.msra.mxu0 %v1466
  %1586 = vmatprep.subr.bf16.mxu0 %v1465
  %1587 = vmatpush1.bf16.msra.mxu0 %v1464
  %1588 = vmatprep.subr.bf16.mxu0 %v1463
  %1589 = vmatpush1.bf16.msra.mxu0 %v1462
  %1590 = vmatprep.subr.bf16.mxu0 %v1461
  %1591 = vmatpush1.bf16.msra.mxu0 %v1460
  %1592 = vmatprep.subr.bf16.mxu0 %v1459
  %1593 = vmatpush1.bf16.msra.mxu0 %v1458
  %1594 = vmatprep.subr.bf16.mxu0 %v1457
  %1595 = vmatpush1.bf16.msra.mxu0 %v1456
  %1596 = vmatprep.subr.bf16.mxu0 %v1455
  %1597 = vmatpush1.bf16.msra.mxu0 %v1454
  %1598 = vmatprep.subr.bf16.mxu0 %v1485
  %1599 = vmatpush2.bf16.msra.mxu0 %v1484
  %1600 = vmatprep.subr.bf16.mxu0 %v1483
  %1601 = vmatpush2.bf16.msra.mxu0 %v1482
  %1602 = vmatprep.subr.bf16.mxu0 %v1481
  %1603 = vmatpush2.bf16.msra.mxu0 %v1480
  %1604 = vmatprep.subr.bf16.mxu0 %v1479
  %1605 = vmatpush2.bf16.msra.mxu0 %v1478
  %1606 = vmatprep.subr.bf16.mxu0 %v1477
  %1607 = vmatpush2.bf16.msra.mxu0 %v1476
  %1608 = vmatprep.subr.bf16.mxu0 %v1475
  %1609 = vmatpush2.bf16.msra.mxu0 %v1474
  %1610 = vmatprep.subr.bf16.mxu0 %v1473
  %1611 = vmatpush2.bf16.msra.mxu0 %v1472
  %1612 = vmatprep.subr.bf16.mxu0 %v1471
  %1613 = vmatpush2.bf16.msra.mxu0 %v1470
  %1614 = vmatprep.mubr.bf16.mxu0 %v693
  %1615 = vmatmul.mubr.bf16.gmra.mxu0 %v692
  %v1616 = vpop.f32.mrf.mxu0
  %v1617 = vadd.f32 %v1255, %v1616
  %v1618 = vpop.f32.mrf.mxu0
  %v1619 = vadd.f32 %v1259, %v1618
  %v1620 = vpop.f32.mrf.mxu0
  %v1621 = vadd.f32 %v1255, %v1620
  %v1622 = vpop.f32.mrf.mxu0
  %v1623 = vadd.f32 %v1259, %v1622
  %1624 = vdwg.mxu0
  %1625 = vmatprep.subr.bf16.mxu0 %v1501
  %1626 = vmatpush1.bf16.msra.mxu0 %v1500
  %1627 = vmatprep.subr.bf16.mxu0 %v1499
  %1628 = vmatpush1.bf16.msra.mxu0 %v1498
  %1629 = vmatprep.subr.bf16.mxu0 %v1497
  %1630 = vmatpush1.bf16.msra.mxu0 %v1496
  %1631 = vmatprep.subr.bf16.mxu0 %v1495
  %1632 = vmatpush1.bf16.msra.mxu0 %v1494
  %1633 = vmatprep.subr.bf16.mxu0 %v1493
  %1634 = vmatpush1.bf16.msra.mxu0 %v1492
  %1635 = vmatprep.subr.bf16.mxu0 %v1491
  %1636 = vmatpush1.bf16.msra.mxu0 %v1490
  %1637 = vmatprep.subr.bf16.mxu0 %v1489
  %1638 = vmatpush1.bf16.msra.mxu0 %v1488
  %1639 = vmatprep.subr.bf16.mxu0 %v1487
  %1640 = vmatpush1.bf16.msra.mxu0 %v1486
  %1641 = vmatprep.subr.bf16.mxu0 %v1517
  %1642 = vmatpush2.bf16.msra.mxu0 %v1516
  %1643 = vmatprep.subr.bf16.mxu0 %v1515
  %1644 = vmatpush2.bf16.msra.mxu0 %v1514
  %1645 = vmatprep.subr.bf16.mxu0 %v1513
  %1646 = vmatpush2.bf16.msra.mxu0 %v1512
  %1647 = vmatprep.subr.bf16.mxu0 %v1511
  %1648 = vmatpush2.bf16.msra.mxu0 %v1510
  %1649 = vmatprep.subr.bf16.mxu0 %v1509
  %1650 = vmatpush2.bf16.msra.mxu0 %v1508
  %1651 = vmatprep.subr.bf16.mxu0 %v1507
  %1652 = vmatpush2.bf16.msra.mxu0 %v1506
  %1653 = vmatprep.subr.bf16.mxu0 %v1505
  %1654 = vmatpush2.bf16.msra.mxu0 %v1504
  %1655 = vmatprep.subr.bf16.mxu0 %v1503
  %1656 = vmatpush2.bf16.msra.mxu0 %v1502
  %1657 = vmatprep.mubr.bf16.mxu0 %v695
  %1658 = vmatmul.mubr.bf16.gmra.mxu0 %v694
  %v1659 = vpop.f32.mrf.mxu0
  %v1660 = vadd.f32 %v1617, %v1659
  %v1661 = vpop.f32.mrf.mxu0
  %v1662 = vadd.f32 %v1619, %v1661
  %v1663 = vpop.f32.mrf.mxu0
  %v1664 = vadd.f32 %v1621, %v1663
  %v1665 = vpop.f32.mrf.mxu0
  %v1666 = vadd.f32 %v1623, %v1665
  %1667 = vdwg.mxu0
  %v1668 = vtanh.pop %v1660
  %v1669 = vtanh.pop %v1662
  %v1670 = vtanh.pop %v1664
  %v1671 = vtanh.pop %v1666
  %1672 = vst [vmem:[%s7 + $0x10] sm:$0xff] %v1668
  %1673 = vst [vmem:[%s7 + $0x18] sm:$0xff] %v1669
  %1674 = vst [vmem:[%s7 + $0x48] sm:$0xff] %v1670
  %1675 = vst [vmem:[%s7 + $0x50] sm:$0xff] %v1671
  %v1676 = vld [vmem:[%s5 + $0x10] sm:$0xff]
  %v1677 = vld [vmem:[%s5 + $0x2c] sm:$0xff]
  %v1678 = vld [vmem:[%s5 + $0x48] sm:$0xff]
  %v1679 = vld [vmem:[%s5 + $0x64] sm:$0xff]
  %v1680 = vld [vmem:[%s5 + $0x80] sm:$0xff]
  %v1681 = vld [vmem:[%s5 + $0x9c] sm:$0xff]
  %v1682 = vld [vmem:[%s5 + $0xb8] sm:$0xff]
  %v1683 = vld [vmem:[%s5 + $0xd4] sm:$0xff]
  %v1684 = vld [vmem:[%s5 + $0xf0] sm:$0xff]
  %v1685 = vld [vmem:[%s5 + $0x10c] sm:$0xff]
  %v1686 = vld [vmem:[%s5 + $0x128] sm:$0xff]
  %v1687 = vld [vmem:[%s5 + $0x144] sm:$0xff]
  %v1688 = vld [vmem:[%s5 + $0x160] sm:$0xff]
  %v1689 = vld [vmem:[%s5 + $0x17c] sm:$0xff]
  %v1690 = vld [vmem:[%s5 + $0x198] sm:$0xff]
  %v1691 = vld [vmem:[%s5 + $0x1b4] sm:$0xff]
  %v1692 = vld [vmem:[%s5 + $0x1d0] sm:$0xff]
  %v1693 = vld [vmem:[%s5 + $0x1ec] sm:$0xff]
  %v1694 = vld [vmem:[%s5 + $0x208] sm:$0xff]
  %v1695 = vld [vmem:[%s5 + $0x224] sm:$0xff]
  %v1696 = vld [vmem:[%s5 + $0x240] sm:$0xff]
  %v1697 = vld [vmem:[%s5 + $0x25c] sm:$0xff]
  %v1698 = vld [vmem:[%s5 + $0x278] sm:$0xff]
  %v1699 = vld [vmem:[%s5 + $0x294] sm:$0xff]
  %v1700 = vld [vmem:[%s5 + $0x2b0] sm:$0xff]
  %v1701 = vld [vmem:[%s5 + $0x2cc] sm:$0xff]
  %v1702 = vld [vmem:[%s5 + $0x2e8] sm:$0xff]
  %v1703 = vld [vmem:[%s5 + $0x304] sm:$0xff]
  %v1704 = vld [vmem:[%s5 + $0x320] sm:$0xff]
  %v1705 = vld [vmem:[%s5 + $0x33c] sm:$0xff]
  %v1706 = vld [vmem:[%s5 + $0x358] sm:$0xff]
  %v1707 = vld [vmem:[%s5 + $0x374] sm:$0xff]
  %v1708 = vld [vmem:[%s5 + $0x390] sm:$0xff]
  %v1709 = vld [vmem:[%s5 + $0x3ac] sm:$0xff]
  %v1710 = vld [vmem:[%s5 + $0x3c8] sm:$0xff]
  %v1711 = vld [vmem:[%s5 + $0x3e4] sm:$0xff]
  %v1712 = vld [vmem:[%s5 + $0x400] sm:$0xff]
  %v1713 = vld [vmem:[%s5 + $0x41c] sm:$0xff]
  %v1714 = vld [vmem:[%s5 + $0x438] sm:$0xff]
  %v1715 = vld [vmem:[%s5 + $0x454] sm:$0xff]
  %v1716 = vld [vmem:[%s5 + $0x470] sm:$0xff]
  %v1717 = vld [vmem:[%s5 + $0x48c] sm:$0xff]
  %v1718 = vld [vmem:[%s5 + $0x4a8] sm:$0xff]
  %v1719 = vld [vmem:[%s5 + $0x4c4] sm:$0xff]
  %v1720 = vld [vmem:[%s5 + $0x4e0] sm:$0xff]
  %v1721 = vld [vmem:[%s5 + $0x4fc] sm:$0xff]
  %v1722 = vld [vmem:[%s5 + $0x518] sm:$0xff]
  %v1723 = vld [vmem:[%s5 + $0x534] sm:$0xff]
  %v1724 = vld [vmem:[%s5 + $0x550] sm:$0xff]
  %v1725 = vld [vmem:[%s5 + $0x56c] sm:$0xff]
  %v1726 = vld [vmem:[%s5 + $0x588] sm:$0xff]
  %v1727 = vld [vmem:[%s5 + $0x5a4] sm:$0xff]
  %v1728 = vld [vmem:[%s5 + $0x5c0] sm:$0xff]
  %v1729 = vld [vmem:[%s5 + $0x5dc] sm:$0xff]
  %v1730 = vld [vmem:[%s5 + $0x5f8] sm:$0xff]
  %v1731 = vld [vmem:[%s5 + $0x614] sm:$0xff]
  %v1732 = vld [vmem:[%s5 + $0x630] sm:$0xff]
  %v1733 = vld [vmem:[%s5 + $0x64c] sm:$0xff]
  %v1734 = vld [vmem:[%s5 + $0x668] sm:$0xff]
  %v1735 = vld [vmem:[%s5 + $0x684] sm:$0xff]
  %v1736 = vld [vmem:[%s5 + $0x6a0] sm:$0xff]
  %v1737 = vld [vmem:[%s5 + $0x6bc] sm:$0xff]
  %v1738 = vld [vmem:[%s5 + $0x6d8] sm:$0xff]
  %v1739 = vld [vmem:[%s5 + $0x6f4] sm:$0xff]
  %v1740 = vld [vmem:[%s6 + $0x4] sm:$0x3]
  %v1742 = vlaneseq
  %v1743 = vshrl.u32 %v1742, 7
  %v1744 = vsub.s32 0, %v1743
  %v1745 = vrot.slane %v1740, %v1744
  %v1746 = vlaneseq
  %v1747 = vshrl.u32 %v1746, 7
  %v1748 = vsub.s32 1, %v1747
  %v1749 = vrot.slane %v1740, %v1748
  %v1816 = vunpack.c.l.b16 %v1676
  %v1817 = vunpack.c.h.b16 %v1676
  %v1818 = vunpack.c.l.b16 %v1677
  %v1819 = vunpack.c.h.b16 %v1677
  %v1820 = vunpack.c.l.b16 %v1678
  %v1821 = vunpack.c.h.b16 %v1678
  %v1822 = vunpack.c.l.b16 %v1679
  %v1823 = vunpack.c.h.b16 %v1679
  %v1824 = vunpack.c.l.b16 %v1680
  %v1825 = vunpack.c.h.b16 %v1680
  %v1826 = vunpack.c.l.b16 %v1681
  %v1827 = vunpack.c.h.b16 %v1681
  %v1828 = vunpack.c.l.b16 %v1682
  %v1829 = vunpack.c.h.b16 %v1682
  %v1830 = vunpack.c.l.b16 %v1683
  %v1831 = vunpack.c.h.b16 %v1683
  %v1832 = vunpack.c.l.b16 %v1684
  %v1833 = vunpack.c.h.b16 %v1684
  %v1834 = vunpack.c.l.b16 %v1685
  %v1835 = vunpack.c.h.b16 %v1685
  %v1836 = vunpack.c.l.b16 %v1686
  %v1837 = vunpack.c.h.b16 %v1686
  %v1838 = vunpack.c.l.b16 %v1687
  %v1839 = vunpack.c.h.b16 %v1687
  %v1840 = vunpack.c.l.b16 %v1688
  %v1841 = vunpack.c.h.b16 %v1688
  %v1842 = vunpack.c.l.b16 %v1689
  %v1843 = vunpack.c.h.b16 %v1689
  %v1844 = vunpack.c.l.b16 %v1690
  %v1845 = vunpack.c.h.b16 %v1690
  %v1846 = vunpack.c.l.b16 %v1691
  %v1847 = vunpack.c.h.b16 %v1691
  %v1848 = vunpack.c.l.b16 %v1692
  %v1849 = vunpack.c.h.b16 %v1692
  %v1850 = vunpack.c.l.b16 %v1693
  %v1851 = vunpack.c.h.b16 %v1693
  %v1852 = vunpack.c.l.b16 %v1694
  %v1853 = vunpack.c.h.b16 %v1694
  %v1854 = vunpack.c.l.b16 %v1695
  %v1855 = vunpack.c.h.b16 %v1695
  %v1856 = vunpack.c.l.b16 %v1696
  %v1857 = vunpack.c.h.b16 %v1696
  %v1858 = vunpack.c.l.b16 %v1697
  %v1859 = vunpack.c.h.b16 %v1697
  %v1860 = vunpack.c.l.b16 %v1698
  %v1861 = vunpack.c.h.b16 %v1698
  %v1862 = vunpack.c.l.b16 %v1699
  %v1863 = vunpack.c.h.b16 %v1699
  %v1864 = vunpack.c.l.b16 %v1700
  %v1865 = vunpack.c.h.b16 %v1700
  %v1866 = vunpack.c.l.b16 %v1701
  %v1867 = vunpack.c.h.b16 %v1701
  %v1868 = vunpack.c.l.b16 %v1702
  %v1869 = vunpack.c.h.b16 %v1702
  %v1870 = vunpack.c.l.b16 %v1703
  %v1871 = vunpack.c.h.b16 %v1703
  %v1872 = vunpack.c.l.b16 %v1704
  %v1873 = vunpack.c.h.b16 %v1704
  %v1874 = vunpack.c.l.b16 %v1705
  %v1875 = vunpack.c.h.b16 %v1705
  %v1876 = vunpack.c.l.b16 %v1706
  %v1877 = vunpack.c.h.b16 %v1706
  %v1878 = vunpack.c.l.b16 %v1707
  %v1879 = vunpack.c.h.b16 %v1707
  %v1880 = vunpack.c.l.b16 %v1708
  %v1881 = vunpack.c.h.b16 %v1708
  %v1882 = vunpack.c.l.b16 %v1709
  %v1883 = vunpack.c.h.b16 %v1709
  %v1884 = vunpack.c.l.b16 %v1710
  %v1885 = vunpack.c.h.b16 %v1710
  %v1886 = vunpack.c.l.b16 %v1711
  %v1887 = vunpack.c.h.b16 %v1711
  %v1888 = vunpack.c.l.b16 %v1712
  %v1889 = vunpack.c.h.b16 %v1712
  %v1890 = vunpack.c.l.b16 %v1713
  %v1891 = vunpack.c.h.b16 %v1713
  %v1892 = vunpack.c.l.b16 %v1714
  %v1893 = vunpack.c.h.b16 %v1714
  %v1894 = vunpack.c.l.b16 %v1715
  %v1895 = vunpack.c.h.b16 %v1715
  %v1896 = vunpack.c.l.b16 %v1716
  %v1897 = vunpack.c.h.b16 %v1716
  %v1898 = vunpack.c.l.b16 %v1717
  %v1899 = vunpack.c.h.b16 %v1717
  %v1900 = vunpack.c.l.b16 %v1718
  %v1901 = vunpack.c.h.b16 %v1718
  %v1902 = vunpack.c.l.b16 %v1719
  %v1903 = vunpack.c.h.b16 %v1719
  %v1904 = vunpack.c.l.b16 %v1720
  %v1905 = vunpack.c.h.b16 %v1720
  %v1906 = vunpack.c.l.b16 %v1721
  %v1907 = vunpack.c.h.b16 %v1721
  %v1908 = vunpack.c.l.b16 %v1722
  %v1909 = vunpack.c.h.b16 %v1722
  %v1910 = vunpack.c.l.b16 %v1723
  %v1911 = vunpack.c.h.b16 %v1723
  %v1912 = vunpack.c.l.b16 %v1724
  %v1913 = vunpack.c.h.b16 %v1724
  %v1914 = vunpack.c.l.b16 %v1725
  %v1915 = vunpack.c.h.b16 %v1725
  %v1916 = vunpack.c.l.b16 %v1726
  %v1917 = vunpack.c.h.b16 %v1726
  %v1918 = vunpack.c.l.b16 %v1727
  %v1919 = vunpack.c.h.b16 %v1727
  %v1920 = vunpack.c.l.b16 %v1728
  %v1921 = vunpack.c.h.b16 %v1728
  %v1922 = vunpack.c.l.b16 %v1729
  %v1923 = vunpack.c.h.b16 %v1729
  %v1924 = vunpack.c.l.b16 %v1730
  %v1925 = vunpack.c.h.b16 %v1730
  %v1926 = vunpack.c.l.b16 %v1731
  %v1927 = vunpack.c.h.b16 %v1731
  %v1928 = vunpack.c.l.b16 %v1732
  %v1929 = vunpack.c.h.b16 %v1732
  %v1930 = vunpack.c.l.b16 %v1733
  %v1931 = vunpack.c.h.b16 %v1733
  %v1932 = vunpack.c.l.b16 %v1734
  %v1933 = vunpack.c.h.b16 %v1734
  %v1934 = vunpack.c.l.b16 %v1735
  %v1935 = vunpack.c.h.b16 %v1735
  %v1936 = vunpack.c.l.b16 %v1736
  %v1937 = vunpack.c.h.b16 %v1736
  %v1938 = vunpack.c.l.b16 %v1737
  %v1939 = vunpack.c.h.b16 %v1737
  %v1940 = vunpack.c.l.b16 %v1738
  %v1941 = vunpack.c.h.b16 %v1738
  %v1942 = vunpack.c.l.b16 %v1739
  %v1943 = vunpack.c.h.b16 %v1739
  %v1944 = vpack.c.b16 %v1818, %v1816
  %v1945 = vpack.c.b16 %v1819, %v1817
  %v1946 = vpack.c.b16 %v1822, %v1820
  %v1947 = vpack.c.b16 %v1823, %v1821
  %v1948 = vpack.c.b16 %v1826, %v1824
  %v1949 = vpack.c.b16 %v1827, %v1825
  %v1950 = vpack.c.b16 %v1830, %v1828
  %v1951 = vpack.c.b16 %v1831, %v1829
  %v1952 = vpack.c.b16 %v1834, %v1832
  %v1953 = vpack.c.b16 %v1835, %v1833
  %v1954 = vpack.c.b16 %v1838, %v1836
  %v1955 = vpack.c.b16 %v1839, %v1837
  %v1956 = vpack.c.b16 %v1842, %v1840
  %v1957 = vpack.c.b16 %v1843, %v1841
  %v1958 = vpack.c.b16 %v1846, %v1844
  %v1959 = vpack.c.b16 %v1847, %v1845
  %v1960 = vpack.c.b16 %v1850, %v1848
  %v1961 = vpack.c.b16 %v1851, %v1849
  %v1962 = vpack.c.b16 %v1854, %v1852
  %v1963 = vpack.c.b16 %v1855, %v1853
  %v1964 = vpack.c.b16 %v1858, %v1856
  %v1965 = vpack.c.b16 %v1859, %v1857
  %v1966 = vpack.c.b16 %v1862, %v1860
  %v1967 = vpack.c.b16 %v1863, %v1861
  %v1968 = vpack.c.b16 %v1866, %v1864
  %v1969 = vpack.c.b16 %v1867, %v1865
  %v1970 = vpack.c.b16 %v1870, %v1868
  %v1971 = vpack.c.b16 %v1871, %v1869
  %v1972 = vpack.c.b16 %v1874, %v1872
  %v1973 = vpack.c.b16 %v1875, %v1873
  %v1974 = vpack.c.b16 %v1878, %v1876
  %v1975 = vpack.c.b16 %v1879, %v1877
  %v1976 = vpack.c.b16 %v1882, %v1880
  %v1977 = vpack.c.b16 %v1883, %v1881
  %v1978 = vpack.c.b16 %v1886, %v1884
  %v1979 = vpack.c.b16 %v1887, %v1885
  %v1980 = vpack.c.b16 %v1890, %v1888
  %v1981 = vpack.c.b16 %v1891, %v1889
  %v1982 = vpack.c.b16 %v1894, %v1892
  %v1983 = vpack.c.b16 %v1895, %v1893
  %v1984 = vpack.c.b16 %v1898, %v1896
  %v1985 = vpack.c.b16 %v1899, %v1897
  %v1986 = vpack.c.b16 %v1902, %v1900
  %v1987 = vpack.c.b16 %v1903, %v1901
  %v1988 = vpack.c.b16 %v1906, %v1904
  %v1989 = vpack.c.b16 %v1907, %v1905
  %v1990 = vpack.c.b16 %v1910, %v1908
  %v1991 = vpack.c.b16 %v1911, %v1909
  %v1992 = vpack.c.b16 %v1914, %v1912
  %v1993 = vpack.c.b16 %v1915, %v1913
  %v1994 = vpack.c.b16 %v1918, %v1916
  %v1995 = vpack.c.b16 %v1919, %v1917
  %v1996 = vpack.c.b16 %v1922, %v1920
  %v1997 = vpack.c.b16 %v1923, %v1921
  %v1998 = vpack.c.b16 %v1926, %v1924
  %v1999 = vpack.c.b16 %v1927, %v1925
  %v2000 = vpack.c.b16 %v1930, %v1928
  %v2001 = vpack.c.b16 %v1931, %v1929
  %v2002 = vpack.c.b16 %v1934, %v1932
  %v2003 = vpack.c.b16 %v1935, %v1933
  %v2004 = vpack.c.b16 %v1938, %v1936
  %v2005 = vpack.c.b16 %v1939, %v1937
  %v2006 = vpack.c.b16 %v1942, %v1940
  %v2007 = vpack.c.b16 %v1943, %v1941
  %2072 = vmatprep.subr.bf16.mxu0 %v1959
  %2073 = vmatpush1.bf16.msra.mxu0 %v1958
  %2074 = vmatprep.subr.bf16.mxu0 %v1957
  %2075 = vmatpush1.bf16.msra.mxu0 %v1956
  %2076 = vmatprep.subr.bf16.mxu0 %v1955
  %2077 = vmatpush1.bf16.msra.mxu0 %v1954
  %2078 = vmatprep.subr.bf16.mxu0 %v1953
  %2079 = vmatpush1.bf16.msra.mxu0 %v1952
  %2080 = vmatprep.subr.bf16.mxu0 %v1951
  %2081 = vmatpush1.bf16.msra.mxu0 %v1950
  %2082 = vmatprep.subr.bf16.mxu0 %v1949
  %2083 = vmatpush1.bf16.msra.mxu0 %v1948
  %2084 = vmatprep.subr.bf16.mxu0 %v1947
  %2085 = vmatpush1.bf16.msra.mxu0 %v1946
  %2086 = vmatprep.subr.bf16.mxu0 %v1945
  %2087 = vmatpush1.bf16.msra.mxu0 %v1944
  %2088 = vmatprep.subr.bf16.mxu0 %v1975
  %2089 = vmatpush2.bf16.msra.mxu0 %v1974
  %2090 = vmatprep.subr.bf16.mxu0 %v1973
  %2091 = vmatpush2.bf16.msra.mxu0 %v1972
  %2092 = vmatprep.subr.bf16.mxu0 %v1971
  %2093 = vmatpush2.bf16.msra.mxu0 %v1970
  %2094 = vmatprep.subr.bf16.mxu0 %v1969
  %2095 = vmatpush2.bf16.msra.mxu0 %v1968
  %2096 = vmatprep.subr.bf16.mxu0 %v1967
  %2097 = vmatpush2.bf16.msra.mxu0 %v1966
  %2098 = vmatprep.subr.bf16.mxu0 %v1965
  %2099 = vmatpush2.bf16.msra.mxu0 %v1964
  %2100 = vmatprep.subr.bf16.mxu0 %v1963
  %2101 = vmatpush2.bf16.msra.mxu0 %v1962
  %2102 = vmatprep.subr.bf16.mxu0 %v1961
  %2103 = vmatpush2.bf16.msra.mxu0 %v1960
  %2104 = vmatprep.mubr.bf16.mxu0 %v693
  %2105 = vmatmul.mubr.bf16.gmra.mxu0 %v692
  %v2106 = vpop.f32.mrf.mxu0
  %v2107 = vadd.f32 %v1745, %v2106
  %v2108 = vpop.f32.mrf.mxu0
  %v2109 = vadd.f32 %v1749, %v2108
  %v2110 = vpop.f32.mrf.mxu0
  %v2111 = vadd.f32 %v1745, %v2110
  %v2112 = vpop.f32.mrf.mxu0
  %v2113 = vadd.f32 %v1749, %v2112
  %2114 = vdwg.mxu0
  %2115 = vmatprep.subr.bf16.mxu0 %v1991
  %2116 = vmatpush1.bf16.msra.mxu0 %v1990
  %2117 = vmatprep.subr.bf16.mxu0 %v1989
  %2118 = vmatpush1.bf16.msra.mxu0 %v1988
  %2119 = vmatprep.subr.bf16.mxu0 %v1987
  %2120 = vmatpush1.bf16.msra.mxu0 %v1986
  %2121 = vmatprep.subr.bf16.mxu0 %v1985
  %2122 = vmatpush1.bf16.msra.mxu0 %v1984
  %2123 = vmatprep.subr.bf16.mxu0 %v1983
  %2124 = vmatpush1.bf16.msra.mxu0 %v1982
  %2125 = vmatprep.subr.bf16.mxu0 %v1981
  %2126 = vmatpush1.bf16.msra.mxu0 %v1980
  %2127 = vmatprep.subr.bf16.mxu0 %v1979
  %2128 = vmatpush1.bf16.msra.mxu0 %v1978
  %2129 = vmatprep.subr.bf16.mxu0 %v1977
  %2130 = vmatpush1.bf16.msra.mxu0 %v1976
  %2131 = vmatprep.subr.bf16.mxu0 %v2007
  %2132 = vmatpush2.bf16.msra.mxu0 %v2006
  %2133 = vmatprep.subr.bf16.mxu0 %v2005
  %2134 = vmatpush2.bf16.msra.mxu0 %v2004
  %2135 = vmatprep.subr.bf16.mxu0 %v2003
  %2136 = vmatpush2.bf16.msra.mxu0 %v2002
  %2137 = vmatprep.subr.bf16.mxu0 %v2001
  %2138 = vmatpush2.bf16.msra.mxu0 %v2000
  %2139 = vmatprep.subr.bf16.mxu0 %v1999
  %2140 = vmatpush2.bf16.msra.mxu0 %v1998
  %2141 = vmatprep.subr.bf16.mxu0 %v1997
  %2142 = vmatpush2.bf16.msra.mxu0 %v1996
  %2143 = vmatprep.subr.bf16.mxu0 %v1995
  %2144 = vmatpush2.bf16.msra.mxu0 %v1994
  %2145 = vmatprep.subr.bf16.mxu0 %v1993
  %2146 = vmatpush2.bf16.msra.mxu0 %v1992
  %2147 = vmatprep.mubr.bf16.mxu0 %v695
  %2148 = vmatmul.mubr.bf16.gmra.mxu0 %v694
  %v2149 = vpop.f32.mrf.mxu0
  %v2150 = vadd.f32 %v2107, %v2149
  %v2151 = vpop.f32.mrf.mxu0
  %v2152 = vadd.f32 %v2109, %v2151
  %v2153 = vpop.f32.mrf.mxu0
  %v2154 = vadd.f32 %v2111, %v2153
  %v2155 = vpop.f32.mrf.mxu0
  %v2156 = vadd.f32 %v2113, %v2155
  %2157 = vdwg.mxu0
  %v2158 = vtanh.pop %v2150
  %v2159 = vtanh.pop %v2152
  %v2160 = vtanh.pop %v2154
  %v2161 = vtanh.pop %v2156
  %2162 = vst [vmem:[%s7 + $0x20] sm:$0xff] %v2158
  %2163 = vst [vmem:[%s7 + $0x28] sm:$0xff] %v2159
  %2164 = vst [vmem:[%s7 + $0x58] sm:$0xff] %v2160
  %2165 = vst [vmem:[%s7 + $0x60] sm:$0xff] %v2161
  %v2166 = vld [vmem:[%s5 + $0x18] sm:$0xf]
  %v2167 = vld [vmem:[%s5 + $0x34] sm:$0xf]
  %v2168 = vld [vmem:[%s5 + $0x50] sm:$0xf]
  %v2169 = vld [vmem:[%s5 + $0x6c] sm:$0xf]
  %v2170 = vld [vmem:[%s5 + $0x88] sm:$0xf]
  %v2171 = vld [vmem:[%s5 + $0xa4] sm:$0xf]
  %v2172 = vld [vmem:[%s5 + $0xc0] sm:$0xf]
  %v2173 = vld [vmem:[%s5 + $0xdc] sm:$0xf]
  %v2174 = vld [vmem:[%s5 + $0xf8] sm:$0xf]
  %v2175 = vld [vmem:[%s5 + $0x114] sm:$0xf]
  %v2176 = vld [vmem:[%s5 + $0x130] sm:$0xf]
  %v2177 = vld [vmem:[%s5 + $0x14c] sm:$0xf]
  %v2178 = vld [vmem:[%s5 + $0x168] sm:$0xf]
  %v2179 = vld [vmem:[%s5 + $0x184] sm:$0xf]
  %v2180 = vld [vmem:[%s5 + $0x1a0] sm:$0xf]
  %v2181 = vld [vmem:[%s5 + $0x1bc] sm:$0xf]
  %v2182 = vld [vmem:[%s5 + $0x1d8] sm:$0xf]
  %v2183 = vld [vmem:[%s5 + $0x1f4] sm:$0xf]
  %v2184 = vld [vmem:[%s5 + $0x210] sm:$0xf]
  %v2185 = vld [vmem:[%s5 + $0x22c] sm:$0xf]
  %v2186 = vld [vmem:[%s5 + $0x248] sm:$0xf]
  %v2187 = vld [vmem:[%s5 + $0x264] sm:$0xf]
  %v2188 = vld [vmem:[%s5 + $0x280] sm:$0xf]
  %v2189 = vld [vmem:[%s5 + $0x29c] sm:$0xf]
  %v2190 = vld [vmem:[%s5 + $0x2b8] sm:$0xf]
  %v2191 = vld [vmem:[%s5 + $0x2d4] sm:$0xf]
  %v2192 = vld [vmem:[%s5 + $0x2f0] sm:$0xf]
  %v2193 = vld [vmem:[%s5 + $0x30c] sm:$0xf]
  %v2194 = vld [vmem:[%s5 + $0x328] sm:$0xf]
  %v2195 = vld [vmem:[%s5 + $0x344] sm:$0xf]
  %v2196 = vld [vmem:[%s5 + $0x360] sm:$0xf]
  %v2197 = vld [vmem:[%s5 + $0x37c] sm:$0xf]
  %v2198 = vld [vmem:[%s5 + $0x398] sm:$0xf]
  %v2199 = vld [vmem:[%s5 + $0x3b4] sm:$0xf]
  %v2200 = vld [vmem:[%s5 + $0x3d0] sm:$0xf]
  %v2201 = vld [vmem:[%s5 + $0x3ec] sm:$0xf]
  %v2202 = vld [vmem:[%s5 + $0x408] sm:$0xf]
  %v2203 = vld [vmem:[%s5 + $0x424] sm:$0xf]
  %v2204 = vld [vmem:[%s5 + $0x440] sm:$0xf]
  %v2205 = vld [vmem:[%s5 + $0x45c] sm:$0xf]
  %v2206 = vld [vmem:[%s5 + $0x478] sm:$0xf]
  %v2207 = vld [vmem:[%s5 + $0x494] sm:$0xf]
  %v2208 = vld [vmem:[%s5 + $0x4b0] sm:$0xf]
  %v2209 = vld [vmem:[%s5 + $0x4cc] sm:$0xf]
  %v2210 = vld [vmem:[%s5 + $0x4e8] sm:$0xf]
  %v2211 = vld [vmem:[%s5 + $0x504] sm:$0xf]
  %v2212 = vld [vmem:[%s5 + $0x520] sm:$0xf]
  %v2213 = vld [vmem:[%s5 + $0x53c] sm:$0xf]
  %v2214 = vld [vmem:[%s5 + $0x558] sm:$0xf]
  %v2215 = vld [vmem:[%s5 + $0x574] sm:$0xf]
  %v2216 = vld [vmem:[%s5 + $0x590] sm:$0xf]
  %v2217 = vld [vmem:[%s5 + $0x5ac] sm:$0xf]
  %v2218 = vld [vmem:[%s5 + $0x5c8] sm:$0xf]
  %v2219 = vld [vmem:[%s5 + $0x5e4] sm:$0xf]
  %v2220 = vld [vmem:[%s5 + $0x600] sm:$0xf]
  %v2221 = vld [vmem:[%s5 + $0x61c] sm:$0xf]
  %v2222 = vld [vmem:[%s5 + $0x638] sm:$0xf]
  %v2223 = vld [vmem:[%s5 + $0x654] sm:$0xf]
  %v2224 = vld [vmem:[%s5 + $0x670] sm:$0xf]
  %v2225 = vld [vmem:[%s5 + $0x68c] sm:$0xf]
  %v2226 = vld [vmem:[%s5 + $0x6a8] sm:$0xf]
  %v2227 = vld [vmem:[%s5 + $0x6c4] sm:$0xf]
  %v2228 = vld [vmem:[%s5 + $0x6e0] sm:$0xf]
  %v2229 = vld [vmem:[%s5 + $0x6fc] sm:$0xf]
  %v2230 = vld [vmem:[%s6 + $0x6] sm:$0x1]
  %v2232 = vlaneseq
  %v2233 = vshrl.u32 %v2232, 7
  %v2234 = vsub.s32 0, %v2233
  %v2235 = vrot.slane %v2230, %v2234
  %v2301 = vunpack.c.l.b16 %v2166
  %v2302 = vunpack.c.l.b16 %v2167
  %v2303 = vunpack.c.l.b16 %v2168
  %v2304 = vunpack.c.l.b16 %v2169
  %v2305 = vunpack.c.l.b16 %v2170
  %v2306 = vunpack.c.l.b16 %v2171
  %v2307 = vunpack.c.l.b16 %v2172
  %v2308 = vunpack.c.l.b16 %v2173
  %v2309 = vunpack.c.l.b16 %v2174
  %v2310 = vunpack.c.l.b16 %v2175
  %v2311 = vunpack.c.l.b16 %v2176
  %v2312 = vunpack.c.l.b16 %v2177
  %v2313 = vunpack.c.l.b16 %v2178
  %v2314 = vunpack.c.l.b16 %v2179
  %v2315 = vunpack.c.l.b16 %v2180
  %v2316 = vunpack.c.l.b16 %v2181
  %v2317 = vunpack.c.l.b16 %v2182
  %v2318 = vunpack.c.l.b16 %v2183
  %v2319 = vunpack.c.l.b16 %v2184
  %v2320 = vunpack.c.l.b16 %v2185
  %v2321 = vunpack.c.l.b16 %v2186
  %v2322 = vunpack.c.l.b16 %v2187
  %v2323 = vunpack.c.l.b16 %v2188
  %v2324 = vunpack.c.l.b16 %v2189
  %v2325 = vunpack.c.l.b16 %v2190
  %v2326 = vunpack.c.l.b16 %v2191
  %v2327 = vunpack.c.l.b16 %v2192
  %v2328 = vunpack.c.l.b16 %v2193
  %v2329 = vunpack.c.l.b16 %v2194
  %v2330 = vunpack.c.l.b16 %v2195
  %v2331 = vunpack.c.l.b16 %v2196
  %v2332 = vunpack.c.l.b16 %v2197
  %v2333 = vunpack.c.l.b16 %v2198
  %v2334 = vunpack.c.l.b16 %v2199
  %v2335 = vunpack.c.l.b16 %v2200
  %v2336 = vunpack.c.l.b16 %v2201
  %v2337 = vunpack.c.l.b16 %v2202
  %v2338 = vunpack.c.l.b16 %v2203
  %v2339 = vunpack.c.l.b16 %v2204
  %v2340 = vunpack.c.l.b16 %v2205
  %v2341 = vunpack.c.l.b16 %v2206
  %v2342 = vunpack.c.l.b16 %v2207
  %v2343 = vunpack.c.l.b16 %v2208
  %v2344 = vunpack.c.l.b16 %v2209
  %v2345 = vunpack.c.l.b16 %v2210
  %v2346 = vunpack.c.l.b16 %v2211
  %v2347 = vunpack.c.l.b16 %v2212
  %v2348 = vunpack.c.l.b16 %v2213
  %v2349 = vunpack.c.l.b16 %v2214
  %v2350 = vunpack.c.l.b16 %v2215
  %v2351 = vunpack.c.l.b16 %v2216
  %v2352 = vunpack.c.l.b16 %v2217
  %v2353 = vunpack.c.l.b16 %v2218
  %v2354 = vunpack.c.l.b16 %v2219
  %v2355 = vunpack.c.l.b16 %v2220
  %v2356 = vunpack.c.l.b16 %v2221
  %v2357 = vunpack.c.l.b16 %v2222
  %v2358 = vunpack.c.l.b16 %v2223
  %v2359 = vunpack.c.l.b16 %v2224
  %v2360 = vunpack.c.l.b16 %v2225
  %v2361 = vunpack.c.l.b16 %v2226
  %v2362 = vunpack.c.l.b16 %v2227
  %v2363 = vunpack.c.l.b16 %v2228
  %v2364 = vunpack.c.l.b16 %v2229
  %v2365 = vpack.c.b16 %v2302, %v2301
  %v2366 = vpack.c.b16 %v2304, %v2303
  %v2367 = vpack.c.b16 %v2306, %v2305
  %v2368 = vpack.c.b16 %v2308, %v2307
  %v2369 = vpack.c.b16 %v2310, %v2309
  %v2370 = vpack.c.b16 %v2312, %v2311
  %v2371 = vpack.c.b16 %v2314, %v2313
  %v2372 = vpack.c.b16 %v2316, %v2315
  %v2373 = vpack.c.b16 %v2318, %v2317
  %v2374 = vpack.c.b16 %v2320, %v2319
  %v2375 = vpack.c.b16 %v2322, %v2321
  %v2376 = vpack.c.b16 %v2324, %v2323
  %v2377 = vpack.c.b16 %v2326, %v2325
  %v2378 = vpack.c.b16 %v2328, %v2327
  %v2379 = vpack.c.b16 %v2330, %v2329
  %v2380 = vpack.c.b16 %v2332, %v2331
  %v2381 = vpack.c.b16 %v2334, %v2333
  %v2382 = vpack.c.b16 %v2336, %v2335
  %v2383 = vpack.c.b16 %v2338, %v2337
  %v2384 = vpack.c.b16 %v2340, %v2339
  %v2385 = vpack.c.b16 %v2342, %v2341
  %v2386 = vpack.c.b16 %v2344, %v2343
  %v2387 = vpack.c.b16 %v2346, %v2345
  %v2388 = vpack.c.b16 %v2348, %v2347
  %v2389 = vpack.c.b16 %v2350, %v2349
  %v2390 = vpack.c.b16 %v2352, %v2351
  %v2391 = vpack.c.b16 %v2354, %v2353
  %v2392 = vpack.c.b16 %v2356, %v2355
  %v2393 = vpack.c.b16 %v2358, %v2357
  %v2394 = vpack.c.b16 %v2360, %v2359
  %v2395 = vpack.c.b16 %v2362, %v2361
  %v2396 = vpack.c.b16 %v2364, %v2363
  %2429 = vmatprep.subr.bf16.mxu0 0
  %2430 = vmatpush1.bf16.msra.mxu0 %v2372
  %2431 = vmatprep.subr.bf16.mxu0 0
  %2432 = vmatpush1.bf16.msra.mxu0 %v2371
  %2433 = vmatprep.subr.bf16.mxu0 0
  %2434 = vmatpush1.bf16.msra.mxu0 %v2370
  %2435 = vmatprep.subr.bf16.mxu0 0
  %2436 = vmatpush1.bf16.msra.mxu0 %v2369
  %2437 = vmatprep.subr.bf16.mxu0 0
  %2438 = vmatpush1.bf16.msra.mxu0 %v2368
  %2439 = vmatprep.subr.bf16.mxu0 0
  %2440 = vmatpush1.bf16.msra.mxu0 %v2367
  %2441 = vmatprep.subr.bf16.mxu0 0
  %2442 = vmatpush1.bf16.msra.mxu0 %v2366
  %2443 = vmatprep.subr.bf16.mxu0 0
  %2444 = vmatpush1.bf16.msra.mxu0 %v2365
  %2445 = vmatprep.subr.bf16.mxu0 0
  %2446 = vmatpush2.bf16.msra.mxu0 %v2380
  %2447 = vmatprep.subr.bf16.mxu0 0
  %2448 = vmatpush2.bf16.msra.mxu0 %v2379
  %2449 = vmatprep.subr.bf16.mxu0 0
  %2450 = vmatpush2.bf16.msra.mxu0 %v2378
  %2451 = vmatprep.subr.bf16.mxu0 0
  %2452 = vmatpush2.bf16.msra.mxu0 %v2377
  %2453 = vmatprep.subr.bf16.mxu0 0
  %2454 = vmatpush2.bf16.msra.mxu0 %v2376
  %2455 = vmatprep.subr.bf16.mxu0 0
  %2456 = vmatpush2.bf16.msra.mxu0 %v2375
  %2457 = vmatprep.subr.bf16.mxu0 0
  %2458 = vmatpush2.bf16.msra.mxu0 %v2374
  %2459 = vmatprep.subr.bf16.mxu0 0
  %2460 = vmatpush2.bf16.msra.mxu0 %v2373
  %2461 = vmatprep.mubr.bf16.mxu0 %v693
  %2462 = vmatmul.mubr.bf16.gmra.mxu0 %v692
  %v2463 = vpop.f32.mrf.mxu0
  %v2464 = vadd.f32 %v2235, %v2463
  %v2465 = vpop.f32.mrf.mxu0
  %v2466 = vpop.f32.mrf.mxu0
  %v2467 = vadd.f32 %v2235, %v2466
  %v2468 = vpop.f32.mrf.mxu0
  %2469 = vdwg.mxu0
  %2470 = vmatprep.subr.bf16.mxu0 0
  %2471 = vmatpush1.bf16.msra.mxu0 %v2388
  %2472 = vmatprep.subr.bf16.mxu0 0
  %2473 = vmatpush1.bf16.msra.mxu0 %v2387
  %2474 = vmatprep.subr.bf16.mxu0 0
  %2475 = vmatpush1.bf16.msra.mxu0 %v2386
  %2476 = vmatprep.subr.bf16.mxu0 0
  %2477 = vmatpush1.bf16.msra.mxu0 %v2385
  %2478 = vmatprep.subr.bf16.mxu0 0
  %2479 = vmatpush1.bf16.msra.mxu0 %v2384
  %2480 = vmatprep.subr.bf16.mxu0 0
  %2481 = vmatpush1.bf16.msra.mxu0 %v2383
  %2482 = vmatprep.subr.bf16.mxu0 0
  %2483 = vmatpush1.bf16.msra.mxu0 %v2382
  %2484 = vmatprep.subr.bf16.mxu0 0
  %2485 = vmatpush1.bf16.msra.mxu0 %v2381
  %2486 = vmatprep.subr.bf16.mxu0 0
  %2487 = vmatpush2.bf16.msra.mxu0 %v2396
  %2488 = vmatprep.subr.bf16.mxu0 0
  %2489 = vmatpush2.bf16.msra.mxu0 %v2395
  %2490 = vmatprep.subr.bf16.mxu0 0
  %2491 = vmatpush2.bf16.msra.mxu0 %v2394
  %2492 = vmatprep.subr.bf16.mxu0 0
  %2493 = vmatpush2.bf16.msra.mxu0 %v2393
  %2494 = vmatprep.subr.bf16.mxu0 0
  %2495 = vmatpush2.bf16.msra.mxu0 %v2392
  %2496 = vmatprep.subr.bf16.mxu0 0
  %2497 = vmatpush2.bf16.msra.mxu0 %v2391
  %2498 = vmatprep.subr.bf16.mxu0 0
  %2499 = vmatpush2.bf16.msra.mxu0 %v2390
  %2500 = vmatprep.subr.bf16.mxu0 0
  %2501 = vmatpush2.bf16.msra.mxu0 %v2389
  %2502 = vmatprep.mubr.bf16.mxu0 %v695
  %2503 = vmatmul.mubr.bf16.gmra.mxu0 %v694
  %v2504 = vpop.f32.mrf.mxu0
  %v2505 = vadd.f32 %v2464, %v2504
  %v2506 = vpop.f32.mrf.mxu0
  %v2507 = vpop.f32.mrf.mxu0
  %v2508 = vadd.f32 %v2467, %v2507
  %v2509 = vpop.f32.mrf.mxu0
  %2510 = vdwg.mxu0
  %v2511 = vtanh.pop %v2505
  %v2512 = vtanh.pop %v2508
  %vm2513 = vcmask 130048
  %2514 = vst.msk [vmem:[%s7 + $0x30] sm:$0xff] %vm2513, %v2511
  %2515 = vst.msk [vmem:[%s7 + $0x68] sm:$0xff] %vm2513, %v2512
  // Predicated region
  $region30: #{generator_forward.1} parent=0 // pred_check
    _
  $region31: #{generator_forward.1} parent=0 // pred_check_branch
    %2517 = sbr.rel (0) target = $region33
  $region32: #{generator_forward.1} parent=0 // pred_region
    _
  $region33: #{generator_forward.1} parent=0 // pred_fallthru
    _
  // Predicated region
  $region34: #{generator_forward.1} parent=0 // pred_check
    _
  $region35: #{generator_forward.1} parent=0 // pred_check_branch
    %2519 = sbr.rel (0) target = $region37
  $region36: #{generator_forward.1} parent=0 // pred_region
    _
  $region37: #{generator_forward.1} parent=0 // pred_fallthru
    _

</llo_original>
